<compile_context>
chip_gen: v7x
topology: tpu7x:2x2x1
jax: 0.10.0
libtpu: 0.0.40
codegen_flags: <defaults>
</compile_context>

<pallas_src>
import jax
import jax.numpy as jnp
from jax.experimental import pallas as pl
from jax.experimental.pallas import tpu as pltpu

INPUT_DIM = 500
HIDDEN_DIM = 400
LATENT_DIM = 20

HIDDEN_PAD = 512            # hidden dim padded to a lane multiple (weights only)
LATENT_PAD = 128            # lane offset of logvar inside the fused encoder head
ENC_PAD = 2 * LATENT_PAD    # fused fc21|fc22 output width: [mu ... | logvar ...]


def _vae_kernel(x_ref, eps_ref,
                w1_ref, b1_ref, wenc_ref, benc_ref,
                w3_ref, b3_ref, w4_ref, b4_ref,
                recon_ref, mu_ref, logvar_ref):
    # ---- encode: fc1 -> relu.  bf16 cast happens here, in VMEM. ----
    x = x_ref[...].astype(jnp.bfloat16)                       # (TM, 500)
    h1 = jnp.dot(x, w1_ref[...],
                 preferred_element_type=jnp.float32) + b1_ref[...]
    h1 = jnp.maximum(h1, 0.0)                                 # (TM, 512) f32

    # ---- fused fc21|fc22: one MXU pass.  mu lives in lanes [0:20),
    #      logvar in lanes [128:148) so both slices start 128-aligned. ----
    enc = jnp.dot(h1.astype(jnp.bfloat16), wenc_ref[...],
                  preferred_element_type=jnp.float32) + benc_ref[...]
    mu = enc[:, :LATENT_DIM]                                  # (TM, 20) f32
    logvar = enc[:, LATENT_PAD:LATENT_PAD + LATENT_DIM]       # (TM, 20) f32
    mu_ref[...] = mu
    logvar_ref[...] = logvar

    # ---- reparameterize (eps supplied externally, like torch.randn_like) ----
    z = mu + eps_ref[...] * jnp.exp(0.5 * logvar)             # (TM, 20) f32

    # ---- decode: fc3 -> relu -> fc4 -> sigmoid ----
    h3 = jnp.dot(z.astype(jnp.bfloat16), w3_ref[...],
                 preferred_element_type=jnp.float32) + b3_ref[...]
    h3 = jnp.maximum(h3, 0.0)                                 # (TM, 512) f32
    logits = jnp.dot(h3.astype(jnp.bfloat16), w4_ref[...],
                     preferred_element_type=jnp.float32) + b4_ref[...]
    recon_ref[...] = jax.nn.sigmoid(logits).astype(recon_ref.dtype)


def prepare_params(params):
    """One-time (outside the hot path) padding / fusion / bf16 cast of
    PyTorch-style params.  Weights are (in_features, out_features); biases
    (1, out_features).  Only the hidden dim (400 -> 512) is padded, with zeros,
    so padding never leaks into real outputs.  Input (500) and latent (20)
    dims stay unpadded so activations need no wrapper-side padding at all."""
    w1, b1, w21, b21, w22, b22, w3, b3, w4, b4 = params

    def pad_to(a, shape):
        return jnp.zeros(shape, a.dtype).at[:a.shape[0], :a.shape[1]].set(a)

    w1_p = pad_to(w1, (INPUT_DIM, HIDDEN_PAD)).astype(jnp.bfloat16)   # (500, 512)
    b1_p = pad_to(b1, (1, HIDDEN_PAD))                                # f32

    # fused encoder head: lanes [0:20) = mu (fc21), lanes [128:148) = logvar (fc22)
    wenc = jnp.zeros((HIDDEN_PAD, ENC_PAD), jnp.float32)
    wenc = wenc.at[:HIDDEN_DIM, :LATENT_DIM].set(w21)
    wenc = wenc.at[:HIDDEN_DIM, LATENT_PAD:LATENT_PAD + LATENT_DIM].set(w22)
    wenc = wenc.astype(jnp.bfloat16)
    benc = jnp.zeros((1, ENC_PAD), jnp.float32)
    benc = benc.at[:, :LATENT_DIM].set(b21[0])
    benc = benc.at[:, LATENT_PAD:LATENT_PAD + LATENT_DIM].set(b22[0])

    w3_p = pad_to(w3, (LATENT_DIM, HIDDEN_PAD)).astype(jnp.bfloat16)  # (20, 512)
    b3_p = pad_to(b3, (1, HIDDEN_PAD))
    w4_p = pad_to(w4, (HIDDEN_PAD, INPUT_DIM)).astype(jnp.bfloat16)   # (512, 500)
    b4_p = b4                                                         # (1, 500) f32
    return (w1_p, b1_p, wenc, benc, w3_p, b3_p, w4_p, b4_p)


def _select_tm(batch):
    if batch < 16:
        return batch                      # single exact block (dims == array dims)
    b16 = ((batch + 15) // 16) * 16       # bf16 packs 16 sublanes per vreg
    if b16 <= 128:
        return b16                        # one tile
    if b16 <= 2048:
        return 128                        # >=2 grid steps -> v7x megacore splits batch
    return 512                            # large batch: amortize per-step overhead


def _cost_estimate(batch):
    mm = (INPUT_DIM * HIDDEN_PAD + HIDDEN_PAD * ENC_PAD
          + LATENT_DIM * HIDDEN_PAD + HIDDEN_PAD * INPUT_DIM)
    weight_bytes = 2 * mm + 4 * (HIDDEN_PAD + ENC_PAD + HIDDEN_PAD + INPUT_DIM)
    act_bytes = batch * (4 * INPUT_DIM + 4 * LATENT_DIM            # x, eps reads
                         + 2 * INPUT_DIM + 2 * 4 * LATENT_DIM)     # recon, mu, logvar
    return pl.CostEstimate(flops=2 * batch * mm,
                           transcendentals=batch * (LATENT_DIM + INPUT_DIM),
                           bytes_accessed=weight_bytes + act_bytes)


def vae_forward(x, eps, padded_params, *, tm=None, recon_dtype=jnp.bfloat16):
    """x: (..., INPUT_DIM) float32; eps: (B, LATENT_DIM) float32 standard-normal
    noise (the role of torch.randn_like in the reference module)."""
    x = x.reshape(-1, INPUT_DIM)          # mirrors x.view(-1, input_dim)
    B = x.shape[0]
    TM = _select_tm(B) if tm is None else tm
    grid = (pl.cdiv(B, TM),)

    w1_p, b1_p, wenc, benc, w3_p, b3_p, w4_p, b4_p = padded_params

    def act_spec(cols):                    # tiled over batch -> auto double-buffered
        return pl.BlockSpec((TM, cols), lambda i: (i, 0))

    def res_spec(rows, cols):              # constant index_map -> stays VMEM-resident
        return pl.BlockSpec((rows, cols), lambda i: (0, 0))

    recon, mu, logvar = pl.pallas_call(
        _vae_kernel,
        grid=grid,
        out_shape=(
            jax.ShapeDtypeStruct((B, INPUT_DIM), recon_dtype),    # recon
            jax.ShapeDtypeStruct((B, LATENT_DIM), jnp.float32),   # mu
            jax.ShapeDtypeStruct((B, LATENT_DIM), jnp.float32),   # logvar
        ),
        in_specs=[
            act_spec(INPUT_DIM),                # x       (TM, 500)
            act_spec(LATENT_DIM),               # eps     (TM, 20)
            res_spec(INPUT_DIM, HIDDEN_PAD),    # w1      (500, 512)
            res_spec(1, HIDDEN_PAD),            # b1
            res_spec(HIDDEN_PAD, ENC_PAD),      # w21|w22 (512, 256) fused
            res_spec(1, ENC_PAD),               # b21|b22 fused
            res_spec(LATENT_DIM, HIDDEN_PAD),   # w3      (20, 512)
            res_spec(1, HIDDEN_PAD),            # b3
            res_spec(HIDDEN_PAD, INPUT_DIM),    # w4      (512, 500)
            res_spec(1, INPUT_DIM),             # b4
        ],
        out_specs=(
            act_spec(INPUT_DIM),                # recon   (TM, 500)
            act_spec(LATENT_DIM),               # mu      (TM, 20)
            act_spec(LATENT_DIM),               # logvar  (TM, 20)
        ),
        compiler_params=pltpu.CompilerParams(
            dimension_semantics=("parallel",),  # shard batch tiles across TCs (v7x)
            vmem_limit_bytes=32 << 20,          # >=3x the working set even at TM=512
        ),
        cost_estimate=_cost_estimate(B),
    )(x, eps, w1_p, b1_p, wenc, benc, w3_p, b3_p, w4_p, b4_p)
    return recon, mu, logvar


def init_params(key):
    """PyTorch nn.Linear default init (U[-1/sqrt(fan_in), +1/sqrt(fan_in)]).
    Weights stored as (in_features, out_features); biases as (1, out_features)."""
    def linear(key, fan_in, fan_out):
        kw, kb = jax.random.split(key)
        bound = 1.0 / jnp.sqrt(fan_in)
        w = jax.random.uniform(kw, (fan_in, fan_out), jnp.float32, -bound, bound)
        b = jax.random.uniform(kb, (1, fan_out), jnp.float32, -bound, bound)
        return w, b

    k1, k2, k3, k4, k5 = jax.random.split(key, 5)
    w1, b1 = linear(k1, INPUT_DIM, HIDDEN_DIM)      # fc1
    w21, b21 = linear(k2, HIDDEN_DIM, LATENT_DIM)   # fc21
    w22, b22 = linear(k3, HIDDEN_DIM, LATENT_DIM)   # fc22
    w3, b3 = linear(k4, LATENT_DIM, HIDDEN_DIM)     # fc3
    w4, b4 = linear(k5, HIDDEN_DIM, INPUT_DIM)      # fc4
    return (w1, b1, w21, b21, w22, b22, w3, b3, w4, b4)


if __name__ == "__main__":
    key = jax.random.PRNGKey(0)
    k_params, k_x, k_eps = jax.random.split(key, 3)

    B = 2
    params = init_params(k_params)
    padded = prepare_params(params)
    x = jax.random.uniform(k_x, (B, INPUT_DIM), jnp.float32)      # "image"-like input
    # TODO(synk): torch.randn_like(std) is replaced by an explicit eps input for
    # determinism; an in-kernel pltpu.prng_random_bits draw would also work.
    eps = jax.random.normal(k_eps, (B, LATENT_DIM), jnp.float32)

    recon, mu, logvar = jax.jit(vae_forward)(x, eps, padded)
    jax.block_until_ready((recon, mu, logvar))

    # pure-JAX reference using the same bf16-weight / f32-accumulate recipe
    w1, b1, w21, b21, w22, b22, w3, b3, w4, b4 = params

    def f32dot(a, w):
        return jnp.dot(a.astype(jnp.bfloat16), w.astype(jnp.bfloat16),
                       preferred_element_type=jnp.float32)

    h1_r = jnp.maximum(f32dot(x, w1) + b1, 0.0)
    mu_expected = f32dot(h1_r, w21) + b21
    logvar_expected = f32dot(h1_r, w22) + b22
    z_r = mu_expected + eps * jnp.exp(0.5 * logvar_expected)
    h3_r = jnp.maximum(f32dot(z_r, w3) + b3, 0.0)
    recon_expected = jax.nn.sigmoid(f32dot(h3_r, w4) + b4)

    assert recon.shape == (B, INPUT_DIM) and recon.dtype == jnp.bfloat16
    assert mu.shape == (B, LATENT_DIM) and logvar.shape == (B, LATENT_DIM)
    assert jnp.allclose(mu, mu_expected, atol=1e-2)
    assert jnp.allclose(logvar, logvar_expected, atol=1e-2)
    assert jnp.allclose(recon.astype(jnp.float32), recon_expected, atol=1e-2)

    print("KERNEL_OK")
</pallas_src>

<mosaic_0001>
module attributes {stable_mosaic.version = 11 : i64} {
  func.func @_vae_kernel(%arg0: i32, %arg1: memref<2x500xf32, #tpu.memory_space<vmem>>, %arg2: memref<2x20xf32, #tpu.memory_space<vmem>>, %arg3: memref<500x512xbf16, #tpu.memory_space<vmem>>, %arg4: memref<1x512xf32, #tpu.memory_space<vmem>>, %arg5: memref<512x256xbf16, #tpu.memory_space<vmem>>, %arg6: memref<1x256xf32, #tpu.memory_space<vmem>>, %arg7: memref<20x512xbf16, #tpu.memory_space<vmem>>, %arg8: memref<1x512xf32, #tpu.memory_space<vmem>>, %arg9: memref<512x500xbf16, #tpu.memory_space<vmem>>, %arg10: memref<1x500xf32, #tpu.memory_space<vmem>>, %arg11: memref<2x500xbf16, #tpu.memory_space<vmem>>, %arg12: memref<2x20xf32, #tpu.memory_space<vmem>>, %arg13: memref<2x20xf32, #tpu.memory_space<vmem>>) attributes {dimension_semantics = [#tpu.dimension_semantics<parallel>], iteration_bounds = array<i64: 1>, scalar_prefetch = 0 : i64, scratch_operands = 0 : i64, tpu.core_type = #tpu.core_type<tc>, window_params = [{transform_indices = @transform_0, window_bounds = array<i64: 2, 500>}, {transform_indices = @transform_1, window_bounds = array<i64: 2, 20>}, {pipeline_mode = #tpu.pipeline_mode<synchronous>, transform_indices = @transform_2, window_bounds = array<i64: 500, 512>}, {pipeline_mode = #tpu.pipeline_mode<synchronous>, transform_indices = @transform_3, window_bounds = array<i64: 1, 512>}, {pipeline_mode = #tpu.pipeline_mode<synchronous>, transform_indices = @transform_4, window_bounds = array<i64: 512, 256>}, {pipeline_mode = #tpu.pipeline_mode<synchronous>, transform_indices = @transform_5, window_bounds = array<i64: 1, 256>}, {pipeline_mode = #tpu.pipeline_mode<synchronous>, transform_indices = @transform_6, window_bounds = array<i64: 20, 512>}, {pipeline_mode = #tpu.pipeline_mode<synchronous>, transform_indices = @transform_7, window_bounds = array<i64: 1, 512>}, {pipeline_mode = #tpu.pipeline_mode<synchronous>, transform_indices = @transform_8, window_bounds = array<i64: 512, 500>}, {pipeline_mode = #tpu.pipeline_mode<synchronous>, transform_indices = @transform_9, window_bounds = array<i64: 1, 500>}, {transform_indices = @transform_10, window_bounds = array<i64: 2, 500>}, {transform_indices = @transform_11, window_bounds = array<i64: 2, 20>}, {transform_indices = @transform_12, window_bounds = array<i64: 2, 20>}]} {
    %c0 = arith.constant 0 : index
    %c0_0 = arith.constant 0 : index
    %0 = vector.load %arg1[%c0, %c0_0] : memref<2x500xf32, #tpu.memory_space<vmem>>, vector<2x500xf32>
    %1 = arith.truncf %0 : vector<2x500xf32> to vector<2x500xbf16>
    %c0_1 = arith.constant 0 : index
    %c0_2 = arith.constant 0 : index
    %2 = vector.load %arg3[%c0_1, %c0_2] : memref<500x512xbf16, #tpu.memory_space<vmem>>, vector<500x512xbf16>
    %cst = arith.constant dense<0.000000e+00> : vector<2x512xf32>
    %3 = tpu.matmul %1, %2, %cst {dimension_numbers = #tpu.dot_dimension_numbers<[1], [0], [0], [1], [0, 0, 1, 1], [], []>} : vector<2x500xbf16>, vector<500x512xbf16>, vector<2x512xf32> -> vector<2x512xf32>
    %c0_3 = arith.constant 0 : index
    %c0_4 = arith.constant 0 : index
    %4 = vector.load %arg4[%c0_3, %c0_4] : memref<1x512xf32, #tpu.memory_space<vmem>>, vector<1x512xf32>
    %5 = vector.broadcast %4 : vector<1x512xf32> to vector<2x512xf32>
    %6 = arith.addf %3, %5 : vector<2x512xf32>
    %cst_5 = arith.constant 0.000000e+00 : f32
    %7 = vector.broadcast %cst_5 : f32 to vector<2x512xf32>
    %8 = arith.maximumf %6, %7 : vector<2x512xf32>
    %9 = arith.truncf %8 : vector<2x512xf32> to vector<2x512xbf16>
    %c0_6 = arith.constant 0 : index
    %c0_7 = arith.constant 0 : index
    %10 = vector.load %arg5[%c0_6, %c0_7] : memref<512x256xbf16, #tpu.memory_space<vmem>>, vector<512x256xbf16>
    %cst_8 = arith.constant dense<0.000000e+00> : vector<2x256xf32>
    %11 = tpu.matmul %9, %10, %cst_8 {dimension_numbers = #tpu.dot_dimension_numbers<[1], [0], [0], [1], [0, 0, 1, 1], [], []>} : vector<2x512xbf16>, vector<512x256xbf16>, vector<2x256xf32> -> vector<2x256xf32>
    %c0_9 = arith.constant 0 : index
    %c0_10 = arith.constant 0 : index
    %12 = vector.load %arg6[%c0_9, %c0_10] : memref<1x256xf32, #tpu.memory_space<vmem>>, vector<1x256xf32>
    %13 = vector.broadcast %12 : vector<1x256xf32> to vector<2x256xf32>
    %14 = arith.addf %11, %13 : vector<2x256xf32>
    %15 = vector.extract_strided_slice %14 {offsets = [0, 0], sizes = [2, 20], strides = [1, 1]} : vector<2x256xf32> to vector<2x20xf32>
    %16 = vector.extract_strided_slice %14 {offsets = [0, 128], sizes = [2, 20], strides = [1, 1]} : vector<2x256xf32> to vector<2x20xf32>
    %c0_11 = arith.constant 0 : index
    %c0_12 = arith.constant 0 : index
    %17 = vector.load %arg12[%c0_11, %c0_12] : memref<2x20xf32, #tpu.memory_space<vmem>>, vector<2x20xf32>
    tpu.vector_store %arg12[%c0_11, %c0_12], %15 {strides = array<i32>} : memref<2x20xf32, #tpu.memory_space<vmem>>, vector<2x20xf32>,
    %c0_13 = arith.constant 0 : index
    %c0_14 = arith.constant 0 : index
    %18 = vector.load %arg13[%c0_13, %c0_14] : memref<2x20xf32, #tpu.memory_space<vmem>>, vector<2x20xf32>
    tpu.vector_store %arg13[%c0_13, %c0_14], %16 {strides = array<i32>} : memref<2x20xf32, #tpu.memory_space<vmem>>, vector<2x20xf32>,
    %c0_15 = arith.constant 0 : index
    %c0_16 = arith.constant 0 : index
    %19 = vector.load %arg2[%c0_15, %c0_16] : memref<2x20xf32, #tpu.memory_space<vmem>>, vector<2x20xf32>
    %cst_17 = arith.constant 5.000000e-01 : f32
    %20 = vector.broadcast %cst_17 : f32 to vector<2x20xf32>
    %21 = arith.mulf %20, %16 : vector<2x20xf32>
    %22 = math.exp %21 : vector<2x20xf32>
    %23 = arith.mulf %19, %22 : vector<2x20xf32>
    %24 = arith.addf %15, %23 : vector<2x20xf32>
    %25 = arith.truncf %24 : vector<2x20xf32> to vector<2x20xbf16>
    %c0_18 = arith.constant 0 : index
    %c0_19 = arith.constant 0 : index
    %26 = vector.load %arg7[%c0_18, %c0_19] : memref<20x512xbf16, #tpu.memory_space<vmem>>, vector<20x512xbf16>
    %cst_20 = arith.constant dense<0.000000e+00> : vector<2x512xf32>
    %27 = tpu.matmul %25, %26, %cst_20 {dimension_numbers = #tpu.dot_dimension_numbers<[1], [0], [0], [1], [0, 0, 1, 1], [], []>} : vector<2x20xbf16>, vector<20x512xbf16>, vector<2x512xf32> -> vector<2x512xf32>
    %c0_21 = arith.constant 0 : index
    %c0_22 = arith.constant 0 : index
    %28 = vector.load %arg8[%c0_21, %c0_22] : memref<1x512xf32, #tpu.memory_space<vmem>>, vector<1x512xf32>
    %29 = vector.broadcast %28 : vector<1x512xf32> to vector<2x512xf32>
    %30 = arith.addf %27, %29 : vector<2x512xf32>
    %cst_23 = arith.constant 0.000000e+00 : f32
    %31 = vector.broadcast %cst_23 : f32 to vector<2x512xf32>
    %32 = arith.maximumf %30, %31 : vector<2x512xf32>
    %33 = arith.truncf %32 : vector<2x512xf32> to vector<2x512xbf16>
    %c0_24 = arith.constant 0 : index
    %c0_25 = arith.constant 0 : index
    %34 = vector.load %arg9[%c0_24, %c0_25] : memref<512x500xbf16, #tpu.memory_space<vmem>>, vector<512x500xbf16>
    %cst_26 = arith.constant dense<0.000000e+00> : vector<2x500xf32>
    %35 = tpu.matmul %33, %34, %cst_26 {dimension_numbers = #tpu.dot_dimension_numbers<[1], [0], [0], [1], [0, 0, 1, 1], [], []>} : vector<2x512xbf16>, vector<512x500xbf16>, vector<2x500xf32> -> vector<2x500xf32>
    %c0_27 = arith.constant 0 : index
    %c0_28 = arith.constant 0 : index
    %36 = vector.load %arg10[%c0_27, %c0_28] : memref<1x500xf32, #tpu.memory_space<vmem>>, vector<1x500xf32>
    %37 = vector.broadcast %36 : vector<1x500xf32> to vector<2x500xf32>
    %38 = arith.addf %35, %37 : vector<2x500xf32>
    %39 = arith.negf %38 : vector<2x500xf32>
    %40 = math.exp %39 : vector<2x500xf32>
    %cst_29 = arith.constant 1.000000e+00 : f32
    %41 = vector.broadcast %cst_29 : f32 to vector<2x500xf32>
    %42 = arith.addf %41, %40 : vector<2x500xf32>
    %43 = arith.divf %41, %42 : vector<2x500xf32>
    %44 = arith.truncf %43 : vector<2x500xf32> to vector<2x500xbf16>
    %c0_30 = arith.constant 0 : index
    %c0_31 = arith.constant 0 : index
    %45 = vector.load %arg11[%c0_30, %c0_31] : memref<2x500xbf16, #tpu.memory_space<vmem>>, vector<2x500xbf16>
    tpu.vector_store %arg11[%c0_30, %c0_31], %44 {strides = array<i32>} : memref<2x500xbf16, #tpu.memory_space<vmem>>, vector<2x500xbf16>,
    return
  }
  func.func @transform_0(%arg0: i32) -> (i32, i32) {
    %c0_i32 = arith.constant 0 : i32
    %c0_i32_0 = arith.constant 0 : i32
    return %arg0, %c0_i32 : i32, i32
  }
  func.func @transform_1(%arg0: i32) -> (i32, i32) {
    %c0_i32 = arith.constant 0 : i32
    %c0_i32_0 = arith.constant 0 : i32
    return %arg0, %c0_i32 : i32, i32
  }
  func.func @transform_2(%arg0: i32) -> (i32, i32) {
    %c0_i32 = arith.constant 0 : i32
    %c0_i32_0 = arith.constant 0 : i32
    %c0_i32_1 = arith.constant 0 : i32
    return %c0_i32, %c0_i32_0 : i32, i32
  }
  func.func @transform_3(%arg0: i32) -> (i32, i32) {
    %c0_i32 = arith.constant 0 : i32
    %c0_i32_0 = arith.constant 0 : i32
    %c0_i32_1 = arith.constant 0 : i32
    return %c0_i32, %c0_i32_0 : i32, i32
  }
  func.func @transform_4(%arg0: i32) -> (i32, i32) {
    %c0_i32 = arith.constant 0 : i32
    %c0_i32_0 = arith.constant 0 : i32
    %c0_i32_1 = arith.constant 0 : i32
    return %c0_i32, %c0_i32_0 : i32, i32
  }
  func.func @transform_5(%arg0: i32) -> (i32, i32) {
    %c0_i32 = arith.constant 0 : i32
    %c0_i32_0 = arith.constant 0 : i32
    %c0_i32_1 = arith.constant 0 : i32
    return %c0_i32, %c0_i32_0 : i32, i32
  }
  func.func @transform_6(%arg0: i32) -> (i32, i32) {
    %c0_i32 = arith.constant 0 : i32
    %c0_i32_0 = arith.constant 0 : i32
    %c0_i32_1 = arith.constant 0 : i32
    return %c0_i32, %c0_i32_0 : i32, i32
  }
  func.func @transform_7(%arg0: i32) -> (i32, i32) {
    %c0_i32 = arith.constant 0 : i32
    %c0_i32_0 = arith.constant 0 : i32
    %c0_i32_1 = arith.constant 0 : i32
    return %c0_i32, %c0_i32_0 : i32, i32
  }
  func.func @transform_8(%arg0: i32) -> (i32, i32) {
    %c0_i32 = arith.constant 0 : i32
    %c0_i32_0 = arith.constant 0 : i32
    %c0_i32_1 = arith.constant 0 : i32
    return %c0_i32, %c0_i32_0 : i32, i32
  }
  func.func @transform_9(%arg0: i32) -> (i32, i32) {
    %c0_i32 = arith.constant 0 : i32
    %c0_i32_0 = arith.constant 0 : i32
    %c0_i32_1 = arith.constant 0 : i32
    return %c0_i32, %c0_i32_0 : i32, i32
  }
  func.func @transform_10(%arg0: i32) -> (i32, i32) {
    %c0_i32 = arith.constant 0 : i32
    %c0_i32_0 = arith.constant 0 : i32
    return %arg0, %c0_i32 : i32, i32
  }
  func.func @transform_11(%arg0: i32) -> (i32, i32) {
    %c0_i32 = arith.constant 0 : i32
    %c0_i32_0 = arith.constant 0 : i32
    return %arg0, %c0_i32 : i32, i32
  }
  func.func @transform_12(%arg0: i32) -> (i32, i32) {
    %c0_i32 = arith.constant 0 : i32
    %c0_i32_0 = arith.constant 0 : i32
    return %arg0, %c0_i32 : i32, i32
  }
}

</mosaic_0001>

<llo_original>
// kernel: vae_forward.1
$region0: #{vae_forward.1}
  #allocation0 [shape = 'u32[]', space=smem, size = 0x4, offset = 0x4, fixed_abs, tag = 'smem constant byte address 0x4 - core index']
  #allocation1 [shape = 'u32[144,128]{1,0:T(1,128)}', space=vmem, size = 0x12000, scoped, tag = 'internal scratch']
  %s0 = inlined_call_operand.vmem [shape: f32[2,500], index: 0, kind: input, shape index: {}]
  %s1 = inlined_call_operand.vmem [shape: f32[2,20], index: 1, kind: input, shape index: {}]
  %s2 = inlined_call_operand.vmem [shape: bf16[500,512], index: 2, kind: input, shape index: {}]
  %s3 = inlined_call_operand.vmem [shape: f32[1,512], index: 3, kind: input, shape index: {}]
  %s4 = inlined_call_operand.vmem [shape: bf16[512,256], index: 4, kind: input, shape index: {}]
  %s5 = inlined_call_operand.vmem [shape: f32[1,256], index: 5, kind: input, shape index: {}]
  %s6 = inlined_call_operand.vmem [shape: bf16[20,512], index: 6, kind: input, shape index: {}]
  %s7 = inlined_call_operand.vmem [shape: f32[1,512], index: 7, kind: input, shape index: {}]
  %s8 = inlined_call_operand.vmem [shape: bf16[512,500], index: 8, kind: input, shape index: {}]
  %s9 = inlined_call_operand.vmem [shape: f32[1,500], index: 9, kind: input, shape index: {}]
  %s10 = inlined_call_operand.hbm [shape: bf16[2,500], index: 10, kind: output, shape index: {0}]
  %s11 = inlined_call_operand.hbm [shape: f32[2,20], index: 11, kind: output, shape index: {1}]
  %s12 = inlined_call_operand.hbm [shape: f32[2,20], index: 12, kind: output, shape index: {2}]
  %13 = xla_tuple %s10, %s11, %s12
  %s14 = sld [smem:[#allocation0]]
  $region66: #{vae_forward.1} parent=0
    _
  %s16 = ssub.s32 1, %s14
  %s17 = scalar_select 0, %s16, %s14
  $region1: #{vae_forward.1} parent=0
    #allocation2 [shape = 'u8[2048]{0}', space=vmem, size = 0x800, scoped, tag = 'output window, operand 0, single buffered']
    #allocation3 [shape = 's32[1]{0}', space=sflag, size = 0x4, scoped, tag = 'scoped memory for vae_forward.1']
    #allocation4 [shape = 'u8[1024]{0}', space=vmem, size = 0x400, scoped, tag = 'output window, operand 1, single buffered']
    #allocation5 [shape = 's32[1]{0}', space=sflag, size = 0x4, scoped, tag = 'scoped memory for vae_forward.1']
    #allocation6 [shape = 'u8[1024]{0}', space=vmem, size = 0x400, scoped, tag = 'output window, operand 2, single buffered']
    %18 = vsyncpa [#allocation3], 0
    %19 = vsyncpa [#allocation5], 0
    // Predicated region
    $region2: #{vae_forward.1} parent=1 // pred_check
      _
    $region3: #{vae_forward.1} parent=1 // pred_check_branch
      %21 = sbr.rel (0) target = $region5
    $region4: #{vae_forward.1} parent=1 // pred_region
      _
    $region5: #{vae_forward.1} parent=1 // pred_fallthru
      _
    // Predicated region
    $region6: #{vae_forward.1} parent=1 // pred_check
      _
    $region7: #{vae_forward.1} parent=1 // pred_check_branch
      %23 = sbr.rel (0) target = $region9
    $region8: #{vae_forward.1} parent=1 // pred_region
      _
    $region9: #{vae_forward.1} parent=1 // pred_fallthru
      _
    // Predicated region
    $region10: #{vae_forward.1} parent=1 // pred_check
      _
    $region11: #{vae_forward.1} parent=1 // pred_check_branch
      %25 = sbr.rel (0) target = $region13
    $region12: #{vae_forward.1} parent=1 // pred_region
      _
    $region13: #{vae_forward.1} parent=1 // pred_fallthru
      _
    // Predicated region
    $region14: #{vae_forward.1} parent=1 // pred_check
      _
    $region15: #{vae_forward.1} parent=1 // pred_check_branch
      %27 = sbr.rel (0) target = $region17
    $region16: #{vae_forward.1} parent=1 // pred_region
      _
    $region17: #{vae_forward.1} parent=1 // pred_fallthru
      _
    // Predicated region
    $region18: #{vae_forward.1} parent=1 // pred_check
      _
    $region19: #{vae_forward.1} parent=1 // pred_check_branch
      %29 = sbr.rel (0) target = $region21
    $region20: #{vae_forward.1} parent=1 // pred_region
      _
    $region21: #{vae_forward.1} parent=1 // pred_fallthru
      _
    // Predicated region
    $region22: #{vae_forward.1} parent=1 // pred_check
      _
    $region23: #{vae_forward.1} parent=1 // pred_check_branch
      %31 = sbr.rel (0) target = $region25
    $region24: #{vae_forward.1} parent=1 // pred_region
      _
    $region25: #{vae_forward.1} parent=1 // pred_fallthru
      _
    // Predicated region
    $region26: #{vae_forward.1} parent=1 // pred_check
      _
    $region27: #{vae_forward.1} parent=1 // pred_check_branch
      %33 = sbr.rel (0) target = $region29
    $region28: #{vae_forward.1} parent=1 // pred_region
      _
    $region29: #{vae_forward.1} parent=1 // pred_fallthru
      _
    // Predicated region
    $region30: #{vae_forward.1} parent=1 // pred_check
      _
    $region31: #{vae_forward.1} parent=1 // pred_check_branch
      %35 = sbr.rel (0) target = $region33
    $region32: #{vae_forward.1} parent=1 // pred_region
      _
    $region33: #{vae_forward.1} parent=1 // pred_fallthru
      _
    // Predicated region
    $region34: #{vae_forward.1} parent=1 // pred_check
      _
    $region35: #{vae_forward.1} parent=1 // pred_check_branch
      %37 = sbr.rel (0) target = $region37
    $region36: #{vae_forward.1} parent=1 // pred_region
      _
    $region37: #{vae_forward.1} parent=1 // pred_fallthru
      _
    // Predicated region
    $region38: #{vae_forward.1} parent=1 // pred_check
      _
    $region39: #{vae_forward.1} parent=1 // pred_check_branch
      %39 = sbr.rel (0) target = $region41
    $region40: #{vae_forward.1} parent=1 // pred_region
      _
    $region41: #{vae_forward.1} parent=1 // pred_fallthru
      _
    %v41 = vld [vmem:[%s0] sm:$0xff]
    %v43 = vcombine.high %v41, %v41
    %v45 = vunpack.c.l.s4 1983009808
    %v46 = vunpack.c.0.s8 %v45
    %v47 = vlaneseq
    %v48 = vshrl.u32 %v47, 7
    %v49 = vsub.s32 %v46, %v48
    %v50 = vrot.slane %v41, %v49
    %v52 = vunpack.c.l.s4 1983009808
    %v53 = vunpack.c.0.s8 %v52
    %v54 = vlaneseq
    %v55 = vshrl.u32 %v54, 7
    %v56 = vsub.s32 %v53, %v55
    %v57 = vrot.slane %v43, %v56
    %v58 = vcombine.high %v50, %v50
    %v59 = vcombine.high %v57, %v57
    %v64 = vpack.c.bf16 %v50, %v50
    %v65 = vpack.c.bf16 %v58, %v58
    %v66 = vpack.c.bf16 %v57, %v57
    %v67 = vpack.c.bf16 %v59, %v59
    %v68 = vld [vmem:[%s2] sm:$0xff]
    %v69 = vld [vmem:[%s2 + $0x8] sm:$0xff]
    %v70 = vld [vmem:[%s2 + $0x10] sm:$0xff]
    %v71 = vld [vmem:[%s2 + $0x18] sm:$0xff]
    %v72 = vld [vmem:[%s2 + $0x20] sm:$0xff]
    %v73 = vld [vmem:[%s2 + $0x28] sm:$0xff]
    %v74 = vld [vmem:[%s2 + $0x30] sm:$0xff]
    %v75 = vld [vmem:[%s2 + $0x38] sm:$0xff]
    %v76 = vld [vmem:[%s2 + $0x40] sm:$0xff]
    %v77 = vld [vmem:[%s2 + $0x48] sm:$0xff]
    %v78 = vld [vmem:[%s2 + $0x50] sm:$0xff]
    %v79 = vld [vmem:[%s2 + $0x58] sm:$0xff]
    %v80 = vld [vmem:[%s2 + $0x60] sm:$0xff]
    %v81 = vld [vmem:[%s2 + $0x68] sm:$0xff]
    %v82 = vld [vmem:[%s2 + $0x70] sm:$0xff]
    %v83 = vld [vmem:[%s2 + $0x78] sm:$0xff]
    %v84 = vld [vmem:[%s2 + $0x80] sm:$0xff]
    %v85 = vld [vmem:[%s2 + $0x88] sm:$0xff]
    %v86 = vld [vmem:[%s2 + $0x90] sm:$0xff]
    %v87 = vld [vmem:[%s2 + $0x98] sm:$0xff]
    %v88 = vld [vmem:[%s2 + $0xa0] sm:$0xff]
    %v89 = vld [vmem:[%s2 + $0xa8] sm:$0xff]
    %v90 = vld [vmem:[%s2 + $0xb0] sm:$0xff]
    %v91 = vld [vmem:[%s2 + $0xb8] sm:$0xff]
    %v92 = vld [vmem:[%s2 + $0xc0] sm:$0xff]
    %v93 = vld [vmem:[%s2 + $0xc8] sm:$0xff]
    %v94 = vld [vmem:[%s2 + $0xd0] sm:$0xff]
    %v95 = vld [vmem:[%s2 + $0xd8] sm:$0xff]
    %v96 = vld [vmem:[%s2 + $0xe0] sm:$0xff]
    %v97 = vld [vmem:[%s2 + $0xe8] sm:$0xff]
    %v98 = vld [vmem:[%s2 + $0xf0] sm:$0xff]
    %v99 = vld [vmem:[%s2 + $0xf8] sm:$0xff]
    %v100 = vld [vmem:[%s2 + $0x100] sm:$0xff]
    %v101 = vld [vmem:[%s2 + $0x108] sm:$0xff]
    %v102 = vld [vmem:[%s2 + $0x110] sm:$0xff]
    %v103 = vld [vmem:[%s2 + $0x118] sm:$0xff]
    %v104 = vld [vmem:[%s2 + $0x120] sm:$0xff]
    %v105 = vld [vmem:[%s2 + $0x128] sm:$0xff]
    %v106 = vld [vmem:[%s2 + $0x130] sm:$0xff]
    %v107 = vld [vmem:[%s2 + $0x138] sm:$0xff]
    %v108 = vld [vmem:[%s2 + $0x140] sm:$0xff]
    %v109 = vld [vmem:[%s2 + $0x148] sm:$0xff]
    %v110 = vld [vmem:[%s2 + $0x150] sm:$0xff]
    %v111 = vld [vmem:[%s2 + $0x158] sm:$0xff]
    %v112 = vld [vmem:[%s2 + $0x160] sm:$0xff]
    %v113 = vld [vmem:[%s2 + $0x168] sm:$0xff]
    %v114 = vld [vmem:[%s2 + $0x170] sm:$0xff]
    %v115 = vld [vmem:[%s2 + $0x178] sm:$0xff]
    %v116 = vld [vmem:[%s2 + $0x180] sm:$0xff]
    %v117 = vld [vmem:[%s2 + $0x188] sm:$0xff]
    %v118 = vld [vmem:[%s2 + $0x190] sm:$0xff]
    %v119 = vld [vmem:[%s2 + $0x198] sm:$0xff]
    %v120 = vld [vmem:[%s2 + $0x1a0] sm:$0xff]
    %v121 = vld [vmem:[%s2 + $0x1a8] sm:$0xff]
    %v122 = vld [vmem:[%s2 + $0x1b0] sm:$0xff]
    %v123 = vld [vmem:[%s2 + $0x1b8] sm:$0xff]
    %v124 = vld [vmem:[%s2 + $0x1c0] sm:$0xff]
    %v125 = vld [vmem:[%s2 + $0x1c8] sm:$0xff]
    %v126 = vld [vmem:[%s2 + $0x1d0] sm:$0xff]
    %v127 = vld [vmem:[%s2 + $0x1d8] sm:$0xff]
    %v128 = vld [vmem:[%s2 + $0x1e0] sm:$0xff]
    %v129 = vld [vmem:[%s2 + $0x1e8] sm:$0xff]
    %v130 = vld [vmem:[%s2 + $0x1f0] sm:$0xff]
    %v131 = vld [vmem:[%s2 + $0x1f8] sm:$0xff]
    %v132 = vld [vmem:[%s2 + $0x200] sm:$0xff]
    %v133 = vld [vmem:[%s2 + $0x208] sm:$0xff]
    %v134 = vld [vmem:[%s2 + $0x210] sm:$0xff]
    %v135 = vld [vmem:[%s2 + $0x218] sm:$0xff]
    %v136 = vld [vmem:[%s2 + $0x220] sm:$0xff]
    %v137 = vld [vmem:[%s2 + $0x228] sm:$0xff]
    %v138 = vld [vmem:[%s2 + $0x230] sm:$0xff]
    %v139 = vld [vmem:[%s2 + $0x238] sm:$0xff]
    %v140 = vld [vmem:[%s2 + $0x240] sm:$0xff]
    %v141 = vld [vmem:[%s2 + $0x248] sm:$0xff]
    %v142 = vld [vmem:[%s2 + $0x250] sm:$0xff]
    %v143 = vld [vmem:[%s2 + $0x258] sm:$0xff]
    %v144 = vld [vmem:[%s2 + $0x260] sm:$0xff]
    %v145 = vld [vmem:[%s2 + $0x268] sm:$0xff]
    %v146 = vld [vmem:[%s2 + $0x270] sm:$0xff]
    %v147 = vld [vmem:[%s2 + $0x278] sm:$0xff]
    %v148 = vld [vmem:[%s2 + $0x280] sm:$0xff]
    %v149 = vld [vmem:[%s2 + $0x288] sm:$0xff]
    %v150 = vld [vmem:[%s2 + $0x290] sm:$0xff]
    %v151 = vld [vmem:[%s2 + $0x298] sm:$0xff]
    %v152 = vld [vmem:[%s2 + $0x2a0] sm:$0xff]
    %v153 = vld [vmem:[%s2 + $0x2a8] sm:$0xff]
    %v154 = vld [vmem:[%s2 + $0x2b0] sm:$0xff]
    %v155 = vld [vmem:[%s2 + $0x2b8] sm:$0xff]
    %v156 = vld [vmem:[%s2 + $0x2c0] sm:$0xff]
    %v157 = vld [vmem:[%s2 + $0x2c8] sm:$0xff]
    %v158 = vld [vmem:[%s2 + $0x2d0] sm:$0xff]
    %v159 = vld [vmem:[%s2 + $0x2d8] sm:$0xff]
    %v160 = vld [vmem:[%s2 + $0x2e0] sm:$0xff]
    %v161 = vld [vmem:[%s2 + $0x2e8] sm:$0xff]
    %v162 = vld [vmem:[%s2 + $0x2f0] sm:$0xff]
    %v163 = vld [vmem:[%s2 + $0x2f8] sm:$0xff]
    %v164 = vld [vmem:[%s2 + $0x300] sm:$0xff]
    %v165 = vld [vmem:[%s2 + $0x308] sm:$0xff]
    %v166 = vld [vmem:[%s2 + $0x310] sm:$0xff]
    %v167 = vld [vmem:[%s2 + $0x318] sm:$0xff]
    %v168 = vld [vmem:[%s2 + $0x320] sm:$0xff]
    %v169 = vld [vmem:[%s2 + $0x328] sm:$0xff]
    %v170 = vld [vmem:[%s2 + $0x330] sm:$0xff]
    %v171 = vld [vmem:[%s2 + $0x338] sm:$0xff]
    %v172 = vld [vmem:[%s2 + $0x340] sm:$0xff]
    %v173 = vld [vmem:[%s2 + $0x348] sm:$0xff]
    %v174 = vld [vmem:[%s2 + $0x350] sm:$0xff]
    %v175 = vld [vmem:[%s2 + $0x358] sm:$0xff]
    %v176 = vld [vmem:[%s2 + $0x360] sm:$0xff]
    %v177 = vld [vmem:[%s2 + $0x368] sm:$0xff]
    %v178 = vld [vmem:[%s2 + $0x370] sm:$0xff]
    %v179 = vld [vmem:[%s2 + $0x378] sm:$0xff]
    %v180 = vld [vmem:[%s2 + $0x380] sm:$0xff]
    %v181 = vld [vmem:[%s2 + $0x388] sm:$0xff]
    %v182 = vld [vmem:[%s2 + $0x390] sm:$0xff]
    %v183 = vld [vmem:[%s2 + $0x398] sm:$0xff]
    %v184 = vld [vmem:[%s2 + $0x3a0] sm:$0xff]
    %v185 = vld [vmem:[%s2 + $0x3a8] sm:$0xff]
    %v186 = vld [vmem:[%s2 + $0x3b0] sm:$0xff]
    %v187 = vld [vmem:[%s2 + $0x3b8] sm:$0xff]
    %v188 = vld [vmem:[%s2 + $0x3c0] sm:$0xff]
    %v189 = vld [vmem:[%s2 + $0x3c8] sm:$0xff]
    %v190 = vld [vmem:[%s2 + $0x3d0] sm:$0xff]
    %v191 = vld [vmem:[%s2 + $0x3d8] sm:$0xff]
    %v192 = vld [vmem:[%s2 + $0x3e0] sm:$0x33]
    %v193 = vld [vmem:[%s2 + $0x3e8] sm:$0x33]
    %v194 = vld [vmem:[%s3] sm:$0xf]
    %v196 = vlaneseq
    %v197 = vshrl.u32 %v196, 7
    %v198 = vsub.s32 0, %v197
    %v199 = vrot.slane %v194, %v198
    %v200 = vlaneseq
    %v201 = vshrl.u32 %v200, 7
    %v202 = vsub.s32 1, %v201
    %v203 = vrot.slane %v194, %v202
    %v204 = vlaneseq
    %v205 = vshrl.u32 %v204, 7
    %v206 = vsub.s32 2, %v205
    %v207 = vrot.slane %v194, %v206
    %v208 = vlaneseq
    %v209 = vshrl.u32 %v208, 7
    %v210 = vsub.s32 3, %v209
    %v211 = vrot.slane %v194, %v210
    %v342 = vunpack.c.l.b16 %v68
    %v343 = vunpack.c.h.b16 %v68
    %v344 = vunpack.c.l.b16 %v69
    %v345 = vunpack.c.h.b16 %v69
    %v346 = vunpack.c.l.b16 %v70
    %v347 = vunpack.c.h.b16 %v70
    %v348 = vunpack.c.l.b16 %v71
    %v349 = vunpack.c.h.b16 %v71
    %v350 = vunpack.c.l.b16 %v72
    %v351 = vunpack.c.h.b16 %v72
    %v352 = vunpack.c.l.b16 %v73
    %v353 = vunpack.c.h.b16 %v73
    %v354 = vunpack.c.l.b16 %v74
    %v355 = vunpack.c.h.b16 %v74
    %v356 = vunpack.c.l.b16 %v75
    %v357 = vunpack.c.h.b16 %v75
    %v358 = vunpack.c.l.b16 %v76
    %v359 = vunpack.c.h.b16 %v76
    %v360 = vunpack.c.l.b16 %v77
    %v361 = vunpack.c.h.b16 %v77
    %v362 = vunpack.c.l.b16 %v78
    %v363 = vunpack.c.h.b16 %v78
    %v364 = vunpack.c.l.b16 %v79
    %v365 = vunpack.c.h.b16 %v79
    %v366 = vunpack.c.l.b16 %v80
    %v367 = vunpack.c.h.b16 %v80
    %v368 = vunpack.c.l.b16 %v81
    %v369 = vunpack.c.h.b16 %v81
    %v370 = vunpack.c.l.b16 %v82
    %v371 = vunpack.c.h.b16 %v82
    %v372 = vunpack.c.l.b16 %v83
    %v373 = vunpack.c.h.b16 %v83
    %v374 = vunpack.c.l.b16 %v84
    %v375 = vunpack.c.h.b16 %v84
    %v376 = vunpack.c.l.b16 %v85
    %v377 = vunpack.c.h.b16 %v85
    %v378 = vunpack.c.l.b16 %v86
    %v379 = vunpack.c.h.b16 %v86
    %v380 = vunpack.c.l.b16 %v87
    %v381 = vunpack.c.h.b16 %v87
    %v382 = vunpack.c.l.b16 %v88
    %v383 = vunpack.c.h.b16 %v88
    %v384 = vunpack.c.l.b16 %v89
    %v385 = vunpack.c.h.b16 %v89
    %v386 = vunpack.c.l.b16 %v90
    %v387 = vunpack.c.h.b16 %v90
    %v388 = vunpack.c.l.b16 %v91
    %v389 = vunpack.c.h.b16 %v91
    %v390 = vunpack.c.l.b16 %v92
    %v391 = vunpack.c.h.b16 %v92
    %v392 = vunpack.c.l.b16 %v93
    %v393 = vunpack.c.h.b16 %v93
    %v394 = vunpack.c.l.b16 %v94
    %v395 = vunpack.c.h.b16 %v94
    %v396 = vunpack.c.l.b16 %v95
    %v397 = vunpack.c.h.b16 %v95
    %v398 = vunpack.c.l.b16 %v96
    %v399 = vunpack.c.h.b16 %v96
    %v400 = vunpack.c.l.b16 %v97
    %v401 = vunpack.c.h.b16 %v97
    %v402 = vunpack.c.l.b16 %v98
    %v403 = vunpack.c.h.b16 %v98
    %v404 = vunpack.c.l.b16 %v99
    %v405 = vunpack.c.h.b16 %v99
    %v406 = vunpack.c.l.b16 %v100
    %v407 = vunpack.c.h.b16 %v100
    %v408 = vunpack.c.l.b16 %v101
    %v409 = vunpack.c.h.b16 %v101
    %v410 = vunpack.c.l.b16 %v102
    %v411 = vunpack.c.h.b16 %v102
    %v412 = vunpack.c.l.b16 %v103
    %v413 = vunpack.c.h.b16 %v103
    %v414 = vunpack.c.l.b16 %v104
    %v415 = vunpack.c.h.b16 %v104
    %v416 = vunpack.c.l.b16 %v105
    %v417 = vunpack.c.h.b16 %v105
    %v418 = vunpack.c.l.b16 %v106
    %v419 = vunpack.c.h.b16 %v106
    %v420 = vunpack.c.l.b16 %v107
    %v421 = vunpack.c.h.b16 %v107
    %v422 = vunpack.c.l.b16 %v108
    %v423 = vunpack.c.h.b16 %v108
    %v424 = vunpack.c.l.b16 %v109
    %v425 = vunpack.c.h.b16 %v109
    %v426 = vunpack.c.l.b16 %v110
    %v427 = vunpack.c.h.b16 %v110
    %v428 = vunpack.c.l.b16 %v111
    %v429 = vunpack.c.h.b16 %v111
    %v430 = vunpack.c.l.b16 %v112
    %v431 = vunpack.c.h.b16 %v112
    %v432 = vunpack.c.l.b16 %v113
    %v433 = vunpack.c.h.b16 %v113
    %v434 = vunpack.c.l.b16 %v114
    %v435 = vunpack.c.h.b16 %v114
    %v436 = vunpack.c.l.b16 %v115
    %v437 = vunpack.c.h.b16 %v115
    %v438 = vunpack.c.l.b16 %v116
    %v439 = vunpack.c.h.b16 %v116
    %v440 = vunpack.c.l.b16 %v117
    %v441 = vunpack.c.h.b16 %v117
    %v442 = vunpack.c.l.b16 %v118
    %v443 = vunpack.c.h.b16 %v118
    %v444 = vunpack.c.l.b16 %v119
    %v445 = vunpack.c.h.b16 %v119
    %v446 = vunpack.c.l.b16 %v120
    %v447 = vunpack.c.h.b16 %v120
    %v448 = vunpack.c.l.b16 %v121
    %v449 = vunpack.c.h.b16 %v121
    %v450 = vunpack.c.l.b16 %v122
    %v451 = vunpack.c.h.b16 %v122
    %v452 = vunpack.c.l.b16 %v123
    %v453 = vunpack.c.h.b16 %v123
    %v454 = vunpack.c.l.b16 %v124
    %v455 = vunpack.c.h.b16 %v124
    %v456 = vunpack.c.l.b16 %v125
    %v457 = vunpack.c.h.b16 %v125
    %v458 = vunpack.c.l.b16 %v126
    %v459 = vunpack.c.h.b16 %v126
    %v460 = vunpack.c.l.b16 %v127
    %v461 = vunpack.c.h.b16 %v127
    %v462 = vunpack.c.l.b16 %v128
    %v463 = vunpack.c.h.b16 %v128
    %v464 = vunpack.c.l.b16 %v129
    %v465 = vunpack.c.h.b16 %v129
    %v466 = vunpack.c.l.b16 %v130
    %v467 = vunpack.c.h.b16 %v130
    %v468 = vunpack.c.l.b16 %v131
    %v469 = vunpack.c.h.b16 %v131
    %v470 = vunpack.c.l.b16 %v132
    %v471 = vunpack.c.h.b16 %v132
    %v472 = vunpack.c.l.b16 %v133
    %v473 = vunpack.c.h.b16 %v133
    %v474 = vunpack.c.l.b16 %v134
    %v475 = vunpack.c.h.b16 %v134
    %v476 = vunpack.c.l.b16 %v135
    %v477 = vunpack.c.h.b16 %v135
    %v478 = vunpack.c.l.b16 %v136
    %v479 = vunpack.c.h.b16 %v136
    %v480 = vunpack.c.l.b16 %v137
    %v481 = vunpack.c.h.b16 %v137
    %v482 = vunpack.c.l.b16 %v138
    %v483 = vunpack.c.h.b16 %v138
    %v484 = vunpack.c.l.b16 %v139
    %v485 = vunpack.c.h.b16 %v139
    %v486 = vunpack.c.l.b16 %v140
    %v487 = vunpack.c.h.b16 %v140
    %v488 = vunpack.c.l.b16 %v141
    %v489 = vunpack.c.h.b16 %v141
    %v490 = vunpack.c.l.b16 %v142
    %v491 = vunpack.c.h.b16 %v142
    %v492 = vunpack.c.l.b16 %v143
    %v493 = vunpack.c.h.b16 %v143
    %v494 = vunpack.c.l.b16 %v144
    %v495 = vunpack.c.h.b16 %v144
    %v496 = vunpack.c.l.b16 %v145
    %v497 = vunpack.c.h.b16 %v145
    %v498 = vunpack.c.l.b16 %v146
    %v499 = vunpack.c.h.b16 %v146
    %v500 = vunpack.c.l.b16 %v147
    %v501 = vunpack.c.h.b16 %v147
    %v502 = vunpack.c.l.b16 %v148
    %v503 = vunpack.c.h.b16 %v148
    %v504 = vunpack.c.l.b16 %v149
    %v505 = vunpack.c.h.b16 %v149
    %v506 = vunpack.c.l.b16 %v150
    %v507 = vunpack.c.h.b16 %v150
    %v508 = vunpack.c.l.b16 %v151
    %v509 = vunpack.c.h.b16 %v151
    %v510 = vunpack.c.l.b16 %v152
    %v511 = vunpack.c.h.b16 %v152
    %v512 = vunpack.c.l.b16 %v153
    %v513 = vunpack.c.h.b16 %v153
    %v514 = vunpack.c.l.b16 %v154
    %v515 = vunpack.c.h.b16 %v154
    %v516 = vunpack.c.l.b16 %v155
    %v517 = vunpack.c.h.b16 %v155
    %v518 = vunpack.c.l.b16 %v156
    %v519 = vunpack.c.h.b16 %v156
    %v520 = vunpack.c.l.b16 %v157
    %v521 = vunpack.c.h.b16 %v157
    %v522 = vunpack.c.l.b16 %v158
    %v523 = vunpack.c.h.b16 %v158
    %v524 = vunpack.c.l.b16 %v159
    %v525 = vunpack.c.h.b16 %v159
    %v526 = vunpack.c.l.b16 %v160
    %v527 = vunpack.c.h.b16 %v160
    %v528 = vunpack.c.l.b16 %v161
    %v529 = vunpack.c.h.b16 %v161
    %v530 = vunpack.c.l.b16 %v162
    %v531 = vunpack.c.h.b16 %v162
    %v532 = vunpack.c.l.b16 %v163
    %v533 = vunpack.c.h.b16 %v163
    %v534 = vunpack.c.l.b16 %v164
    %v535 = vunpack.c.h.b16 %v164
    %v536 = vunpack.c.l.b16 %v165
    %v537 = vunpack.c.h.b16 %v165
    %v538 = vunpack.c.l.b16 %v166
    %v539 = vunpack.c.h.b16 %v166
    %v540 = vunpack.c.l.b16 %v167
    %v541 = vunpack.c.h.b16 %v167
    %v542 = vunpack.c.l.b16 %v168
    %v543 = vunpack.c.h.b16 %v168
    %v544 = vunpack.c.l.b16 %v169
    %v545 = vunpack.c.h.b16 %v169
    %v546 = vunpack.c.l.b16 %v170
    %v547 = vunpack.c.h.b16 %v170
    %v548 = vunpack.c.l.b16 %v171
    %v549 = vunpack.c.h.b16 %v171
    %v550 = vunpack.c.l.b16 %v172
    %v551 = vunpack.c.h.b16 %v172
    %v552 = vunpack.c.l.b16 %v173
    %v553 = vunpack.c.h.b16 %v173
    %v554 = vunpack.c.l.b16 %v174
    %v555 = vunpack.c.h.b16 %v174
    %v556 = vunpack.c.l.b16 %v175
    %v557 = vunpack.c.h.b16 %v175
    %v558 = vunpack.c.l.b16 %v176
    %v559 = vunpack.c.h.b16 %v176
    %v560 = vunpack.c.l.b16 %v177
    %v561 = vunpack.c.h.b16 %v177
    %v562 = vunpack.c.l.b16 %v178
    %v563 = vunpack.c.h.b16 %v178
    %v564 = vunpack.c.l.b16 %v179
    %v565 = vunpack.c.h.b16 %v179
    %v566 = vunpack.c.l.b16 %v180
    %v567 = vunpack.c.h.b16 %v180
    %v568 = vunpack.c.l.b16 %v181
    %v569 = vunpack.c.h.b16 %v181
    %v570 = vunpack.c.l.b16 %v182
    %v571 = vunpack.c.h.b16 %v182
    %v572 = vunpack.c.l.b16 %v183
    %v573 = vunpack.c.h.b16 %v183
    %v574 = vunpack.c.l.b16 %v184
    %v575 = vunpack.c.h.b16 %v184
    %v576 = vunpack.c.l.b16 %v185
    %v577 = vunpack.c.h.b16 %v185
    %v578 = vunpack.c.l.b16 %v186
    %v579 = vunpack.c.h.b16 %v186
    %v580 = vunpack.c.l.b16 %v187
    %v581 = vunpack.c.h.b16 %v187
    %v582 = vunpack.c.l.b16 %v188
    %v583 = vunpack.c.h.b16 %v188
    %v584 = vunpack.c.l.b16 %v189
    %v585 = vunpack.c.h.b16 %v189
    %v586 = vunpack.c.l.b16 %v190
    %v587 = vunpack.c.h.b16 %v190
    %v588 = vunpack.c.l.b16 %v191
    %v589 = vunpack.c.h.b16 %v191
    %v590 = vunpack.c.l.b16 %v192
    %v591 = vunpack.c.h.b16 %v192
    %v592 = vunpack.c.l.b16 %v193
    %v593 = vunpack.c.h.b16 %v193
    %v594 = vpack.c.b16 %v346, %v342
    %v595 = vpack.c.b16 %v347, %v343
    %v596 = vpack.c.b16 %v348, %v344
    %v597 = vpack.c.b16 %v349, %v345
    %v598 = vpack.c.b16 %v354, %v350
    %v599 = vpack.c.b16 %v355, %v351
    %v600 = vpack.c.b16 %v356, %v352
    %v601 = vpack.c.b16 %v357, %v353
    %v602 = vpack.c.b16 %v362, %v358
    %v603 = vpack.c.b16 %v363, %v359
    %v604 = vpack.c.b16 %v364, %v360
    %v605 = vpack.c.b16 %v365, %v361
    %v606 = vpack.c.b16 %v370, %v366
    %v607 = vpack.c.b16 %v371, %v367
    %v608 = vpack.c.b16 %v372, %v368
    %v609 = vpack.c.b16 %v373, %v369
    %v610 = vpack.c.b16 %v378, %v374
    %v611 = vpack.c.b16 %v379, %v375
    %v612 = vpack.c.b16 %v380, %v376
    %v613 = vpack.c.b16 %v381, %v377
    %v614 = vpack.c.b16 %v386, %v382
    %v615 = vpack.c.b16 %v387, %v383
    %v616 = vpack.c.b16 %v388, %v384
    %v617 = vpack.c.b16 %v389, %v385
    %v618 = vpack.c.b16 %v394, %v390
    %v619 = vpack.c.b16 %v395, %v391
    %v620 = vpack.c.b16 %v396, %v392
    %v621 = vpack.c.b16 %v397, %v393
    %v622 = vpack.c.b16 %v402, %v398
    %v623 = vpack.c.b16 %v403, %v399
    %v624 = vpack.c.b16 %v404, %v400
    %v625 = vpack.c.b16 %v405, %v401
    %v626 = vpack.c.b16 %v410, %v406
    %v627 = vpack.c.b16 %v411, %v407
    %v628 = vpack.c.b16 %v412, %v408
    %v629 = vpack.c.b16 %v413, %v409
    %v630 = vpack.c.b16 %v418, %v414
    %v631 = vpack.c.b16 %v419, %v415
    %v632 = vpack.c.b16 %v420, %v416
    %v633 = vpack.c.b16 %v421, %v417
    %v634 = vpack.c.b16 %v426, %v422
    %v635 = vpack.c.b16 %v427, %v423
    %v636 = vpack.c.b16 %v428, %v424
    %v637 = vpack.c.b16 %v429, %v425
    %v638 = vpack.c.b16 %v434, %v430
    %v639 = vpack.c.b16 %v435, %v431
    %v640 = vpack.c.b16 %v436, %v432
    %v641 = vpack.c.b16 %v437, %v433
    %v642 = vpack.c.b16 %v442, %v438
    %v643 = vpack.c.b16 %v443, %v439
    %v644 = vpack.c.b16 %v444, %v440
    %v645 = vpack.c.b16 %v445, %v441
    %v646 = vpack.c.b16 %v450, %v446
    %v647 = vpack.c.b16 %v451, %v447
    %v648 = vpack.c.b16 %v452, %v448
    %v649 = vpack.c.b16 %v453, %v449
    %v650 = vpack.c.b16 %v458, %v454
    %v651 = vpack.c.b16 %v459, %v455
    %v652 = vpack.c.b16 %v460, %v456
    %v653 = vpack.c.b16 %v461, %v457
    %v654 = vpack.c.b16 %v466, %v462
    %v655 = vpack.c.b16 %v467, %v463
    %v656 = vpack.c.b16 %v468, %v464
    %v657 = vpack.c.b16 %v469, %v465
    %v658 = vpack.c.b16 %v474, %v470
    %v659 = vpack.c.b16 %v475, %v471
    %v660 = vpack.c.b16 %v476, %v472
    %v661 = vpack.c.b16 %v477, %v473
    %v662 = vpack.c.b16 %v482, %v478
    %v663 = vpack.c.b16 %v483, %v479
    %v664 = vpack.c.b16 %v484, %v480
    %v665 = vpack.c.b16 %v485, %v481
    %v666 = vpack.c.b16 %v490, %v486
    %v667 = vpack.c.b16 %v491, %v487
    %v668 = vpack.c.b16 %v492, %v488
    %v669 = vpack.c.b16 %v493, %v489
    %v670 = vpack.c.b16 %v498, %v494
    %v671 = vpack.c.b16 %v499, %v495
    %v672 = vpack.c.b16 %v500, %v496
    %v673 = vpack.c.b16 %v501, %v497
    %v674 = vpack.c.b16 %v506, %v502
    %v675 = vpack.c.b16 %v507, %v503
    %v676 = vpack.c.b16 %v508, %v504
    %v677 = vpack.c.b16 %v509, %v505
    %v678 = vpack.c.b16 %v514, %v510
    %v679 = vpack.c.b16 %v515, %v511
    %v680 = vpack.c.b16 %v516, %v512
    %v681 = vpack.c.b16 %v517, %v513
    %v682 = vpack.c.b16 %v522, %v518
    %v683 = vpack.c.b16 %v523, %v519
    %v684 = vpack.c.b16 %v524, %v520
    %v685 = vpack.c.b16 %v525, %v521
    %v686 = vpack.c.b16 %v530, %v526
    %v687 = vpack.c.b16 %v531, %v527
    %v688 = vpack.c.b16 %v532, %v528
    %v689 = vpack.c.b16 %v533, %v529
    %v690 = vpack.c.b16 %v538, %v534
    %v691 = vpack.c.b16 %v539, %v535
    %v692 = vpack.c.b16 %v540, %v536
    %v693 = vpack.c.b16 %v541, %v537
    %v694 = vpack.c.b16 %v546, %v542
    %v695 = vpack.c.b16 %v547, %v543
    %v696 = vpack.c.b16 %v548, %v544
    %v697 = vpack.c.b16 %v549, %v545
    %v698 = vpack.c.b16 %v554, %v550
    %v699 = vpack.c.b16 %v555, %v551
    %v700 = vpack.c.b16 %v556, %v552
    %v701 = vpack.c.b16 %v557, %v553
    %v702 = vpack.c.b16 %v562, %v558
    %v703 = vpack.c.b16 %v563, %v559
    %v704 = vpack.c.b16 %v564, %v560
    %v705 = vpack.c.b16 %v565, %v561
    %v706 = vpack.c.b16 %v570, %v566
    %v707 = vpack.c.b16 %v571, %v567
    %v708 = vpack.c.b16 %v572, %v568
    %v709 = vpack.c.b16 %v573, %v569
    %v710 = vpack.c.b16 %v578, %v574
    %v711 = vpack.c.b16 %v579, %v575
    %v712 = vpack.c.b16 %v580, %v576
    %v713 = vpack.c.b16 %v581, %v577
    %v714 = vpack.c.b16 %v586, %v582
    %v715 = vpack.c.b16 %v587, %v583
    %v716 = vpack.c.b16 %v588, %v584
    %v717 = vpack.c.b16 %v589, %v585
    %v718 = vpack.c.b16 %v590, %v590
    %v719 = vpack.c.b16 %v591, %v591
    %v720 = vpack.c.b16 %v592, %v592
    %v721 = vpack.c.b16 %v593, %v593
    %vm846 = vcmask 949248
    %v848 = vsel %vm846, %v67, 0
    %vm850 = vcmask 1041408
    %v852 = vsel %vm850, %v718, 0
    %v855 = vsel %vm850, %v719, 0
    %v858 = vsel %vm850, %v720, 0
    %v861 = vsel %vm850, %v721, 0
    %863 = vmatprep.subr.bf16.mxu0 %v595
    %864 = vmatpush1.bf16.msra.mxu0 %v594
    %865 = vmatprep.subr.bf16.mxu0 %v599
    %866 = vmatpush1.bf16.msra.mxu0 %v598
    %867 = vmatprep.subr.bf16.mxu0 %v603
    %868 = vmatpush1.bf16.msra.mxu0 %v602
    %869 = vmatprep.subr.bf16.mxu0 %v607
    %870 = vmatpush1.bf16.msra.mxu0 %v606
    %871 = vmatprep.subr.bf16.mxu0 %v611
    %872 = vmatpush1.bf16.msra.mxu0 %v610
    %873 = vmatprep.subr.bf16.mxu0 %v615
    %874 = vmatpush1.bf16.msra.mxu0 %v614
    %875 = vmatprep.subr.bf16.mxu0 %v619
    %876 = vmatpush1.bf16.msra.mxu0 %v618
    %877 = vmatprep.subr.bf16.mxu0 %v623
    %878 = vmatpush1.bf16.msra.mxu0 %v622
    %879 = vmatprep.subr.bf16.mxu0 %v627
    %880 = vmatpush1.bf16.msra.mxu0 %v626
    %881 = vmatprep.subr.bf16.mxu0 %v631
    %882 = vmatpush1.bf16.msra.mxu0 %v630
    %883 = vmatprep.subr.bf16.mxu0 %v635
    %884 = vmatpush1.bf16.msra.mxu0 %v634
    %885 = vmatprep.subr.bf16.mxu0 %v639
    %886 = vmatpush1.bf16.msra.mxu0 %v638
    %887 = vmatprep.subr.bf16.mxu0 %v643
    %888 = vmatpush1.bf16.msra.mxu0 %v642
    %889 = vmatprep.subr.bf16.mxu0 %v647
    %890 = vmatpush1.bf16.msra.mxu0 %v646
    %891 = vmatprep.subr.bf16.mxu0 %v651
    %892 = vmatpush1.bf16.msra.mxu0 %v650
    %893 = vmatprep.subr.bf16.mxu0 %v655
    %894 = vmatpush1.bf16.msra.mxu0 %v654
    %895 = vmatprep.mubr.bf16.mxu0 %v65
    %896 = vmatmul.mubr.bf16.gmra.mrb[0].mxu0 %v64
    %v897 = vpop.f32.mrb[0].mxu0
    %v898 = vadd.f32 %v199, %v897
    %v899 = vpop.f32.mrb[0].mxu0
    %v900 = vadd.f32 %v203, %v899
    %v901 = vpop.f32.mrb[0].mxu0
    %v902 = vpop.f32.mrb[0].mxu0
    %903 = vdwg.mxu0
    %904 = vmatprep.subr.bf16.mxu0 %v659
    %905 = vmatpush1.bf16.msra.mxu0 %v658
    %906 = vmatprep.subr.bf16.mxu0 %v663
    %907 = vmatpush1.bf16.msra.mxu0 %v662
    %908 = vmatprep.subr.bf16.mxu0 %v667
    %909 = vmatpush1.bf16.msra.mxu0 %v666
    %910 = vmatprep.subr.bf16.mxu0 %v671
    %911 = vmatpush1.bf16.msra.mxu0 %v670
    %912 = vmatprep.subr.bf16.mxu0 %v675
    %913 = vmatpush1.bf16.msra.mxu0 %v674
    %914 = vmatprep.subr.bf16.mxu0 %v679
    %915 = vmatpush1.bf16.msra.mxu0 %v678
    %916 = vmatprep.subr.bf16.mxu0 %v683
    %917 = vmatpush1.bf16.msra.mxu0 %v682
    %918 = vmatprep.subr.bf16.mxu0 %v687
    %919 = vmatpush1.bf16.msra.mxu0 %v686
    %920 = vmatprep.subr.bf16.mxu0 %v691
    %921 = vmatpush1.bf16.msra.mxu0 %v690
    %922 = vmatprep.subr.bf16.mxu0 %v695
    %923 = vmatpush1.bf16.msra.mxu0 %v694
    %924 = vmatprep.subr.bf16.mxu0 %v699
    %925 = vmatpush1.bf16.msra.mxu0 %v698
    %926 = vmatprep.subr.bf16.mxu0 %v703
    %927 = vmatpush1.bf16.msra.mxu0 %v702
    %928 = vmatprep.subr.bf16.mxu0 %v707
    %929 = vmatpush1.bf16.msra.mxu0 %v706
    %930 = vmatprep.subr.bf16.mxu0 %v711
    %931 = vmatpush1.bf16.msra.mxu0 %v710
    %932 = vmatprep.subr.bf16.mxu0 %v715
    %933 = vmatpush1.bf16.msra.mxu0 %v714
    %934 = vmatprep.subr.bf16.mxu0 %v855
    %935 = vmatpush1.bf16.msra.mxu0 %v852
    %936 = vmatprep.mubr.bf16.mxu0 %v848
    %937 = vmatmul.mubr.bf16.gmra.mrb[0].mxu0 %v66
    %v938 = vpop.f32.mrb[0].mxu0
    %v939 = vadd.f32 %v898, %v938
    %v940 = vpop.f32.mrb[0].mxu0
    %v941 = vadd.f32 %v900, %v940
    %v942 = vpop.f32.mrb[0].mxu0
    %v943 = vpop.f32.mrb[0].mxu0
    %944 = vdwg.mxu0
    %945 = vmatprep.subr.bf16.mxu0 %v597
    %946 = vmatpush1.bf16.msra.mxu0 %v596
    %947 = vmatprep.subr.bf16.mxu0 %v601
    %948 = vmatpush1.bf16.msra.mxu0 %v600
    %949 = vmatprep.subr.bf16.mxu0 %v605
    %950 = vmatpush1.bf16.msra.mxu0 %v604
    %951 = vmatprep.subr.bf16.mxu0 %v609
    %952 = vmatpush1.bf16.msra.mxu0 %v608
    %953 = vmatprep.subr.bf16.mxu0 %v613
    %954 = vmatpush1.bf16.msra.mxu0 %v612
    %955 = vmatprep.subr.bf16.mxu0 %v617
    %956 = vmatpush1.bf16.msra.mxu0 %v616
    %957 = vmatprep.subr.bf16.mxu0 %v621
    %958 = vmatpush1.bf16.msra.mxu0 %v620
    %959 = vmatprep.subr.bf16.mxu0 %v625
    %960 = vmatpush1.bf16.msra.mxu0 %v624
    %961 = vmatprep.subr.bf16.mxu0 %v629
    %962 = vmatpush1.bf16.msra.mxu0 %v628
    %963 = vmatprep.subr.bf16.mxu0 %v633
    %964 = vmatpush1.bf16.msra.mxu0 %v632
    %965 = vmatprep.subr.bf16.mxu0 %v637
    %966 = vmatpush1.bf16.msra.mxu0 %v636
    %967 = vmatprep.subr.bf16.mxu0 %v641
    %968 = vmatpush1.bf16.msra.mxu0 %v640
    %969 = vmatprep.subr.bf16.mxu0 %v645
    %970 = vmatpush1.bf16.msra.mxu0 %v644
    %971 = vmatprep.subr.bf16.mxu0 %v649
    %972 = vmatpush1.bf16.msra.mxu0 %v648
    %973 = vmatprep.subr.bf16.mxu0 %v653
    %974 = vmatpush1.bf16.msra.mxu0 %v652
    %975 = vmatprep.subr.bf16.mxu0 %v657
    %976 = vmatpush1.bf16.msra.mxu0 %v656
    %977 = vmatprep.mubr.bf16.mxu0 %v65
    %978 = vmatmul.mubr.bf16.gmra.mrb[0].mxu0 %v64
    %v979 = vpop.f32.mrb[0].mxu0
    %v980 = vadd.f32 %v207, %v979
    %v981 = vpop.f32.mrb[0].mxu0
    %v982 = vadd.f32 %v211, %v981
    %v983 = vpop.f32.mrb[0].mxu0
    %v984 = vpop.f32.mrb[0].mxu0
    %985 = vdwg.mxu0
    %986 = vmatprep.subr.bf16.mxu0 %v661
    %987 = vmatpush1.bf16.msra.mxu0 %v660
    %988 = vmatprep.subr.bf16.mxu0 %v665
    %989 = vmatpush1.bf16.msra.mxu0 %v664
    %990 = vmatprep.subr.bf16.mxu0 %v669
    %991 = vmatpush1.bf16.msra.mxu0 %v668
    %992 = vmatprep.subr.bf16.mxu0 %v673
    %993 = vmatpush1.bf16.msra.mxu0 %v672
    %994 = vmatprep.subr.bf16.mxu0 %v677
    %995 = vmatpush1.bf16.msra.mxu0 %v676
    %996 = vmatprep.subr.bf16.mxu0 %v681
    %997 = vmatpush1.bf16.msra.mxu0 %v680
    %998 = vmatprep.subr.bf16.mxu0 %v685
    %999 = vmatpush1.bf16.msra.mxu0 %v684
    %1000 = vmatprep.subr.bf16.mxu0 %v689
    %1001 = vmatpush1.bf16.msra.mxu0 %v688
    %1002 = vmatprep.subr.bf16.mxu0 %v693
    %1003 = vmatpush1.bf16.msra.mxu0 %v692
    %1004 = vmatprep.subr.bf16.mxu0 %v697
    %1005 = vmatpush1.bf16.msra.mxu0 %v696
    %1006 = vmatprep.subr.bf16.mxu0 %v701
    %1007 = vmatpush1.bf16.msra.mxu0 %v700
    %1008 = vmatprep.subr.bf16.mxu0 %v705
    %1009 = vmatpush1.bf16.msra.mxu0 %v704
    %1010 = vmatprep.subr.bf16.mxu0 %v709
    %1011 = vmatpush1.bf16.msra.mxu0 %v708
    %1012 = vmatprep.subr.bf16.mxu0 %v713
    %1013 = vmatpush1.bf16.msra.mxu0 %v712
    %1014 = vmatprep.subr.bf16.mxu0 %v717
    %1015 = vmatpush1.bf16.msra.mxu0 %v716
    %1016 = vmatprep.subr.bf16.mxu0 %v861
    %1017 = vmatpush1.bf16.msra.mxu0 %v858
    %1018 = vmatprep.mubr.bf16.mxu0 %v848
    %1019 = vmatmul.mubr.bf16.gmra.mrb[0].mxu0 %v66
    %v1020 = vpop.f32.mrb[0].mxu0
    %v1021 = vadd.f32 %v980, %v1020
    %v1022 = vpop.f32.mrb[0].mxu0
    %v1023 = vadd.f32 %v982, %v1022
    %v1024 = vpop.f32.mrb[0].mxu0
    %v1025 = vpop.f32.mrb[0].mxu0
    %1026 = vdwg.mxu0
    %v1027 = vmax.f32 %v939, 0.0
    %v1028 = vmax.f32 %v941, 0.0
    %v1029 = vmax.f32 %v1021, 0.0
    %v1030 = vmax.f32 %v1023, 0.0
    %v1031 = vpack.c.bf16 %v1027, %v1027
    %v1032 = vpack.c.bf16 %v1028, %v1028
    %v1033 = vpack.c.bf16 %v1029, %v1029
    %v1034 = vpack.c.bf16 %v1030, %v1030
    %v1035 = vld [vmem:[%s4] sm:$0xff]
    %v1036 = vld [vmem:[%s4 + $0x8] sm:$0xff]
    %v1037 = vld [vmem:[%s4 + $0x10] sm:$0xff]
    %v1038 = vld [vmem:[%s4 + $0x18] sm:$0xff]
    %v1039 = vld [vmem:[%s4 + $0x20] sm:$0xff]
    %v1040 = vld [vmem:[%s4 + $0x28] sm:$0xff]
    %v1041 = vld [vmem:[%s4 + $0x30] sm:$0xff]
    %v1042 = vld [vmem:[%s4 + $0x38] sm:$0xff]
    %v1043 = vld [vmem:[%s4 + $0x40] sm:$0xff]
    %v1044 = vld [vmem:[%s4 + $0x48] sm:$0xff]
    %v1045 = vld [vmem:[%s4 + $0x50] sm:$0xff]
    %v1046 = vld [vmem:[%s4 + $0x58] sm:$0xff]
    %v1047 = vld [vmem:[%s4 + $0x60] sm:$0xff]
    %v1048 = vld [vmem:[%s4 + $0x68] sm:$0xff]
    %v1049 = vld [vmem:[%s4 + $0x70] sm:$0xff]
    %v1050 = vld [vmem:[%s4 + $0x78] sm:$0xff]
    %v1051 = vld [vmem:[%s4 + $0x80] sm:$0xff]
    %v1052 = vld [vmem:[%s4 + $0x88] sm:$0xff]
    %v1053 = vld [vmem:[%s4 + $0x90] sm:$0xff]
    %v1054 = vld [vmem:[%s4 + $0x98] sm:$0xff]
    %v1055 = vld [vmem:[%s4 + $0xa0] sm:$0xff]
    %v1056 = vld [vmem:[%s4 + $0xa8] sm:$0xff]
    %v1057 = vld [vmem:[%s4 + $0xb0] sm:$0xff]
    %v1058 = vld [vmem:[%s4 + $0xb8] sm:$0xff]
    %v1059 = vld [vmem:[%s4 + $0xc0] sm:$0xff]
    %v1060 = vld [vmem:[%s4 + $0xc8] sm:$0xff]
    %v1061 = vld [vmem:[%s4 + $0xd0] sm:$0xff]
    %v1062 = vld [vmem:[%s4 + $0xd8] sm:$0xff]
    %v1063 = vld [vmem:[%s4 + $0xe0] sm:$0xff]
    %v1064 = vld [vmem:[%s4 + $0xe8] sm:$0xff]
    %v1065 = vld [vmem:[%s4 + $0xf0] sm:$0xff]
    %v1066 = vld [vmem:[%s4 + $0xf8] sm:$0xff]
    %v1067 = vld [vmem:[%s4 + $0x100] sm:$0xff]
    %v1068 = vld [vmem:[%s4 + $0x108] sm:$0xff]
    %v1069 = vld [vmem:[%s4 + $0x110] sm:$0xff]
    %v1070 = vld [vmem:[%s4 + $0x118] sm:$0xff]
    %v1071 = vld [vmem:[%s4 + $0x120] sm:$0xff]
    %v1072 = vld [vmem:[%s4 + $0x128] sm:$0xff]
    %v1073 = vld [vmem:[%s4 + $0x130] sm:$0xff]
    %v1074 = vld [vmem:[%s4 + $0x138] sm:$0xff]
    %v1075 = vld [vmem:[%s4 + $0x140] sm:$0xff]
    %v1076 = vld [vmem:[%s4 + $0x148] sm:$0xff]
    %v1077 = vld [vmem:[%s4 + $0x150] sm:$0xff]
    %v1078 = vld [vmem:[%s4 + $0x158] sm:$0xff]
    %v1079 = vld [vmem:[%s4 + $0x160] sm:$0xff]
    %v1080 = vld [vmem:[%s4 + $0x168] sm:$0xff]
    %v1081 = vld [vmem:[%s4 + $0x170] sm:$0xff]
    %v1082 = vld [vmem:[%s4 + $0x178] sm:$0xff]
    %v1083 = vld [vmem:[%s4 + $0x180] sm:$0xff]
    %v1084 = vld [vmem:[%s4 + $0x188] sm:$0xff]
    %v1085 = vld [vmem:[%s4 + $0x190] sm:$0xff]
    %v1086 = vld [vmem:[%s4 + $0x198] sm:$0xff]
    %v1087 = vld [vmem:[%s4 + $0x1a0] sm:$0xff]
    %v1088 = vld [vmem:[%s4 + $0x1a8] sm:$0xff]
    %v1089 = vld [vmem:[%s4 + $0x1b0] sm:$0xff]
    %v1090 = vld [vmem:[%s4 + $0x1b8] sm:$0xff]
    %v1091 = vld [vmem:[%s4 + $0x1c0] sm:$0xff]
    %v1092 = vld [vmem:[%s4 + $0x1c8] sm:$0xff]
    %v1093 = vld [vmem:[%s4 + $0x1d0] sm:$0xff]
    %v1094 = vld [vmem:[%s4 + $0x1d8] sm:$0xff]
    %v1095 = vld [vmem:[%s4 + $0x1e0] sm:$0xff]
    %v1096 = vld [vmem:[%s4 + $0x1e8] sm:$0xff]
    %v1097 = vld [vmem:[%s4 + $0x1f0] sm:$0xff]
    %v1098 = vld [vmem:[%s4 + $0x1f8] sm:$0xff]
    %v1099 = vld [vmem:[%s5] sm:$0x3]
    %v1101 = vlaneseq
    %v1102 = vshrl.u32 %v1101, 7
    %v1103 = vsub.s32 0, %v1102
    %v1104 = vrot.slane %v1099, %v1103
    %v1105 = vlaneseq
    %v1106 = vshrl.u32 %v1105, 7
    %v1107 = vsub.s32 1, %v1106
    %v1108 = vrot.slane %v1099, %v1107
    %v1175 = vunpack.c.l.b16 %v1035
    %v1176 = vunpack.c.h.b16 %v1035
    %v1177 = vunpack.c.l.b16 %v1036
    %v1178 = vunpack.c.h.b16 %v1036
    %v1179 = vunpack.c.l.b16 %v1037
    %v1180 = vunpack.c.h.b16 %v1037
    %v1181 = vunpack.c.l.b16 %v1038
    %v1182 = vunpack.c.h.b16 %v1038
    %v1183 = vunpack.c.l.b16 %v1039
    %v1184 = vunpack.c.h.b16 %v1039
    %v1185 = vunpack.c.l.b16 %v1040
    %v1186 = vunpack.c.h.b16 %v1040
    %v1187 = vunpack.c.l.b16 %v1041
    %v1188 = vunpack.c.h.b16 %v1041
    %v1189 = vunpack.c.l.b16 %v1042
    %v1190 = vunpack.c.h.b16 %v1042
    %v1191 = vunpack.c.l.b16 %v1043
    %v1192 = vunpack.c.h.b16 %v1043
    %v1193 = vunpack.c.l.b16 %v1044
    %v1194 = vunpack.c.h.b16 %v1044
    %v1195 = vunpack.c.l.b16 %v1045
    %v1196 = vunpack.c.h.b16 %v1045
    %v1197 = vunpack.c.l.b16 %v1046
    %v1198 = vunpack.c.h.b16 %v1046
    %v1199 = vunpack.c.l.b16 %v1047
    %v1200 = vunpack.c.h.b16 %v1047
    %v1201 = vunpack.c.l.b16 %v1048
    %v1202 = vunpack.c.h.b16 %v1048
    %v1203 = vunpack.c.l.b16 %v1049
    %v1204 = vunpack.c.h.b16 %v1049
    %v1205 = vunpack.c.l.b16 %v1050
    %v1206 = vunpack.c.h.b16 %v1050
    %v1207 = vunpack.c.l.b16 %v1051
    %v1208 = vunpack.c.h.b16 %v1051
    %v1209 = vunpack.c.l.b16 %v1052
    %v1210 = vunpack.c.h.b16 %v1052
    %v1211 = vunpack.c.l.b16 %v1053
    %v1212 = vunpack.c.h.b16 %v1053
    %v1213 = vunpack.c.l.b16 %v1054
    %v1214 = vunpack.c.h.b16 %v1054
    %v1215 = vunpack.c.l.b16 %v1055
    %v1216 = vunpack.c.h.b16 %v1055
    %v1217 = vunpack.c.l.b16 %v1056
    %v1218 = vunpack.c.h.b16 %v1056
    %v1219 = vunpack.c.l.b16 %v1057
    %v1220 = vunpack.c.h.b16 %v1057
    %v1221 = vunpack.c.l.b16 %v1058
    %v1222 = vunpack.c.h.b16 %v1058
    %v1223 = vunpack.c.l.b16 %v1059
    %v1224 = vunpack.c.h.b16 %v1059
    %v1225 = vunpack.c.l.b16 %v1060
    %v1226 = vunpack.c.h.b16 %v1060
    %v1227 = vunpack.c.l.b16 %v1061
    %v1228 = vunpack.c.h.b16 %v1061
    %v1229 = vunpack.c.l.b16 %v1062
    %v1230 = vunpack.c.h.b16 %v1062
    %v1231 = vunpack.c.l.b16 %v1063
    %v1232 = vunpack.c.h.b16 %v1063
    %v1233 = vunpack.c.l.b16 %v1064
    %v1234 = vunpack.c.h.b16 %v1064
    %v1235 = vunpack.c.l.b16 %v1065
    %v1236 = vunpack.c.h.b16 %v1065
    %v1237 = vunpack.c.l.b16 %v1066
    %v1238 = vunpack.c.h.b16 %v1066
    %v1239 = vunpack.c.l.b16 %v1067
    %v1240 = vunpack.c.h.b16 %v1067
    %v1241 = vunpack.c.l.b16 %v1068
    %v1242 = vunpack.c.h.b16 %v1068
    %v1243 = vunpack.c.l.b16 %v1069
    %v1244 = vunpack.c.h.b16 %v1069
    %v1245 = vunpack.c.l.b16 %v1070
    %v1246 = vunpack.c.h.b16 %v1070
    %v1247 = vunpack.c.l.b16 %v1071
    %v1248 = vunpack.c.h.b16 %v1071
    %v1249 = vunpack.c.l.b16 %v1072
    %v1250 = vunpack.c.h.b16 %v1072
    %v1251 = vunpack.c.l.b16 %v1073
    %v1252 = vunpack.c.h.b16 %v1073
    %v1253 = vunpack.c.l.b16 %v1074
    %v1254 = vunpack.c.h.b16 %v1074
    %v1255 = vunpack.c.l.b16 %v1075
    %v1256 = vunpack.c.h.b16 %v1075
    %v1257 = vunpack.c.l.b16 %v1076
    %v1258 = vunpack.c.h.b16 %v1076
    %v1259 = vunpack.c.l.b16 %v1077
    %v1260 = vunpack.c.h.b16 %v1077
    %v1261 = vunpack.c.l.b16 %v1078
    %v1262 = vunpack.c.h.b16 %v1078
    %v1263 = vunpack.c.l.b16 %v1079
    %v1264 = vunpack.c.h.b16 %v1079
    %v1265 = vunpack.c.l.b16 %v1080
    %v1266 = vunpack.c.h.b16 %v1080
    %v1267 = vunpack.c.l.b16 %v1081
    %v1268 = vunpack.c.h.b16 %v1081
    %v1269 = vunpack.c.l.b16 %v1082
    %v1270 = vunpack.c.h.b16 %v1082
    %v1271 = vunpack.c.l.b16 %v1083
    %v1272 = vunpack.c.h.b16 %v1083
    %v1273 = vunpack.c.l.b16 %v1084
    %v1274 = vunpack.c.h.b16 %v1084
    %v1275 = vunpack.c.l.b16 %v1085
    %v1276 = vunpack.c.h.b16 %v1085
    %v1277 = vunpack.c.l.b16 %v1086
    %v1278 = vunpack.c.h.b16 %v1086
    %v1279 = vunpack.c.l.b16 %v1087
    %v1280 = vunpack.c.h.b16 %v1087
    %v1281 = vunpack.c.l.b16 %v1088
    %v1282 = vunpack.c.h.b16 %v1088
    %v1283 = vunpack.c.l.b16 %v1089
    %v1284 = vunpack.c.h.b16 %v1089
    %v1285 = vunpack.c.l.b16 %v1090
    %v1286 = vunpack.c.h.b16 %v1090
    %v1287 = vunpack.c.l.b16 %v1091
    %v1288 = vunpack.c.h.b16 %v1091
    %v1289 = vunpack.c.l.b16 %v1092
    %v1290 = vunpack.c.h.b16 %v1092
    %v1291 = vunpack.c.l.b16 %v1093
    %v1292 = vunpack.c.h.b16 %v1093
    %v1293 = vunpack.c.l.b16 %v1094
    %v1294 = vunpack.c.h.b16 %v1094
    %v1295 = vunpack.c.l.b16 %v1095
    %v1296 = vunpack.c.h.b16 %v1095
    %v1297 = vunpack.c.l.b16 %v1096
    %v1298 = vunpack.c.h.b16 %v1096
    %v1299 = vunpack.c.l.b16 %v1097
    %v1300 = vunpack.c.h.b16 %v1097
    %v1301 = vunpack.c.l.b16 %v1098
    %v1302 = vunpack.c.h.b16 %v1098
    %v1303 = vpack.c.b16 %v1177, %v1175
    %v1304 = vpack.c.b16 %v1178, %v1176
    %v1305 = vpack.c.b16 %v1181, %v1179
    %v1306 = vpack.c.b16 %v1182, %v1180
    %v1307 = vpack.c.b16 %v1185, %v1183
    %v1308 = vpack.c.b16 %v1186, %v1184
    %v1309 = vpack.c.b16 %v1189, %v1187
    %v1310 = vpack.c.b16 %v1190, %v1188
    %v1311 = vpack.c.b16 %v1193, %v1191
    %v1312 = vpack.c.b16 %v1194, %v1192
    %v1313 = vpack.c.b16 %v1197, %v1195
    %v1314 = vpack.c.b16 %v1198, %v1196
    %v1315 = vpack.c.b16 %v1201, %v1199
    %v1316 = vpack.c.b16 %v1202, %v1200
    %v1317 = vpack.c.b16 %v1205, %v1203
    %v1318 = vpack.c.b16 %v1206, %v1204
    %v1319 = vpack.c.b16 %v1209, %v1207
    %v1320 = vpack.c.b16 %v1210, %v1208
    %v1321 = vpack.c.b16 %v1213, %v1211
    %v1322 = vpack.c.b16 %v1214, %v1212
    %v1323 = vpack.c.b16 %v1217, %v1215
    %v1324 = vpack.c.b16 %v1218, %v1216
    %v1325 = vpack.c.b16 %v1221, %v1219
    %v1326 = vpack.c.b16 %v1222, %v1220
    %v1327 = vpack.c.b16 %v1225, %v1223
    %v1328 = vpack.c.b16 %v1226, %v1224
    %v1329 = vpack.c.b16 %v1229, %v1227
    %v1330 = vpack.c.b16 %v1230, %v1228
    %v1331 = vpack.c.b16 %v1233, %v1231
    %v1332 = vpack.c.b16 %v1234, %v1232
    %v1333 = vpack.c.b16 %v1237, %v1235
    %v1334 = vpack.c.b16 %v1238, %v1236
    %v1335 = vpack.c.b16 %v1241, %v1239
    %v1336 = vpack.c.b16 %v1242, %v1240
    %v1337 = vpack.c.b16 %v1245, %v1243
    %v1338 = vpack.c.b16 %v1246, %v1244
    %v1339 = vpack.c.b16 %v1249, %v1247
    %v1340 = vpack.c.b16 %v1250, %v1248
    %v1341 = vpack.c.b16 %v1253, %v1251
    %v1342 = vpack.c.b16 %v1254, %v1252
    %v1343 = vpack.c.b16 %v1257, %v1255
    %v1344 = vpack.c.b16 %v1258, %v1256
    %v1345 = vpack.c.b16 %v1261, %v1259
    %v1346 = vpack.c.b16 %v1262, %v1260
    %v1347 = vpack.c.b16 %v1265, %v1263
    %v1348 = vpack.c.b16 %v1266, %v1264
    %v1349 = vpack.c.b16 %v1269, %v1267
    %v1350 = vpack.c.b16 %v1270, %v1268
    %v1351 = vpack.c.b16 %v1273, %v1271
    %v1352 = vpack.c.b16 %v1274, %v1272
    %v1353 = vpack.c.b16 %v1277, %v1275
    %v1354 = vpack.c.b16 %v1278, %v1276
    %v1355 = vpack.c.b16 %v1281, %v1279
    %v1356 = vpack.c.b16 %v1282, %v1280
    %v1357 = vpack.c.b16 %v1285, %v1283
    %v1358 = vpack.c.b16 %v1286, %v1284
    %v1359 = vpack.c.b16 %v1289, %v1287
    %v1360 = vpack.c.b16 %v1290, %v1288
    %v1361 = vpack.c.b16 %v1293, %v1291
    %v1362 = vpack.c.b16 %v1294, %v1292
    %v1363 = vpack.c.b16 %v1297, %v1295
    %v1364 = vpack.c.b16 %v1298, %v1296
    %v1365 = vpack.c.b16 %v1301, %v1299
    %v1366 = vpack.c.b16 %v1302, %v1300
    %1431 = vmatprep.subr.bf16.mxu0 %v1304
    %1432 = vmatpush1.bf16.msra.mxu0 %v1303
    %1433 = vmatprep.subr.bf16.mxu0 %v1306
    %1434 = vmatpush1.bf16.msra.mxu0 %v1305
    %1435 = vmatprep.subr.bf16.mxu0 %v1308
    %1436 = vmatpush1.bf16.msra.mxu0 %v1307
    %1437 = vmatprep.subr.bf16.mxu0 %v1310
    %1438 = vmatpush1.bf16.msra.mxu0 %v1309
    %1439 = vmatprep.subr.bf16.mxu0 %v1312
    %1440 = vmatpush1.bf16.msra.mxu0 %v1311
    %1441 = vmatprep.subr.bf16.mxu0 %v1314
    %1442 = vmatpush1.bf16.msra.mxu0 %v1313
    %1443 = vmatprep.subr.bf16.mxu0 %v1316
    %1444 = vmatpush1.bf16.msra.mxu0 %v1315
    %1445 = vmatprep.subr.bf16.mxu0 %v1318
    %1446 = vmatpush1.bf16.msra.mxu0 %v1317
    %1447 = vmatprep.subr.bf16.mxu0 %v1320
    %1448 = vmatpush1.bf16.msra.mxu0 %v1319
    %1449 = vmatprep.subr.bf16.mxu0 %v1322
    %1450 = vmatpush1.bf16.msra.mxu0 %v1321
    %1451 = vmatprep.subr.bf16.mxu0 %v1324
    %1452 = vmatpush1.bf16.msra.mxu0 %v1323
    %1453 = vmatprep.subr.bf16.mxu0 %v1326
    %1454 = vmatpush1.bf16.msra.mxu0 %v1325
    %1455 = vmatprep.subr.bf16.mxu0 %v1328
    %1456 = vmatpush1.bf16.msra.mxu0 %v1327
    %1457 = vmatprep.subr.bf16.mxu0 %v1330
    %1458 = vmatpush1.bf16.msra.mxu0 %v1329
    %1459 = vmatprep.subr.bf16.mxu0 %v1332
    %1460 = vmatpush1.bf16.msra.mxu0 %v1331
    %1461 = vmatprep.subr.bf16.mxu0 %v1334
    %1462 = vmatpush1.bf16.msra.mxu0 %v1333
    %1463 = vmatprep.mubr.bf16.mxu0 %v1032
    %1464 = vmatmul.mubr.bf16.gmra.mrb[0].mxu0 %v1031
    %v1465 = vpop.f32.mrb[0].mxu0
    %v1466 = vadd.f32 %v1104, %v1465
    %v1467 = vpop.f32.mrb[0].mxu0
    %v1468 = vadd.f32 %v1108, %v1467
    %v1469 = vpop.f32.mrb[0].mxu0
    %v1470 = vpop.f32.mrb[0].mxu0
    %1471 = vdwg.mxu0
    %1472 = vmatprep.subr.bf16.mxu0 %v1336
    %1473 = vmatpush1.bf16.msra.mxu0 %v1335
    %1474 = vmatprep.subr.bf16.mxu0 %v1338
    %1475 = vmatpush1.bf16.msra.mxu0 %v1337
    %1476 = vmatprep.subr.bf16.mxu0 %v1340
    %1477 = vmatpush1.bf16.msra.mxu0 %v1339
    %1478 = vmatprep.subr.bf16.mxu0 %v1342
    %1479 = vmatpush1.bf16.msra.mxu0 %v1341
    %1480 = vmatprep.subr.bf16.mxu0 %v1344
    %1481 = vmatpush1.bf16.msra.mxu0 %v1343
    %1482 = vmatprep.subr.bf16.mxu0 %v1346
    %1483 = vmatpush1.bf16.msra.mxu0 %v1345
    %1484 = vmatprep.subr.bf16.mxu0 %v1348
    %1485 = vmatpush1.bf16.msra.mxu0 %v1347
    %1486 = vmatprep.subr.bf16.mxu0 %v1350
    %1487 = vmatpush1.bf16.msra.mxu0 %v1349
    %1488 = vmatprep.subr.bf16.mxu0 %v1352
    %1489 = vmatpush1.bf16.msra.mxu0 %v1351
    %1490 = vmatprep.subr.bf16.mxu0 %v1354
    %1491 = vmatpush1.bf16.msra.mxu0 %v1353
    %1492 = vmatprep.subr.bf16.mxu0 %v1356
    %1493 = vmatpush1.bf16.msra.mxu0 %v1355
    %1494 = vmatprep.subr.bf16.mxu0 %v1358
    %1495 = vmatpush1.bf16.msra.mxu0 %v1357
    %1496 = vmatprep.subr.bf16.mxu0 %v1360
    %1497 = vmatpush1.bf16.msra.mxu0 %v1359
    %1498 = vmatprep.subr.bf16.mxu0 %v1362
    %1499 = vmatpush1.bf16.msra.mxu0 %v1361
    %1500 = vmatprep.subr.bf16.mxu0 %v1364
    %1501 = vmatpush1.bf16.msra.mxu0 %v1363
    %1502 = vmatprep.subr.bf16.mxu0 %v1366
    %1503 = vmatpush1.bf16.msra.mxu0 %v1365
    %1504 = vmatprep.mubr.bf16.mxu0 %v1034
    %1505 = vmatmul.mubr.bf16.gmra.mrb[0].mxu0 %v1033
    %v1506 = vpop.f32.mrb[0].mxu0
    %v1507 = vadd.f32 %v1466, %v1506
    %v1508 = vpop.f32.mrb[0].mxu0
    %v1509 = vadd.f32 %v1468, %v1508
    %v1510 = vpop.f32.mrb[0].mxu0
    %v1511 = vpop.f32.mrb[0].mxu0
    %1512 = vdwg.mxu0
    %vm1513 = vcmask 156672
    %1514 = vst.msk [vmem:[#allocation4] sm:$0x3] %vm1513, %v1507
    %1515 = vst.msk [vmem:[#allocation6] sm:$0x3] %vm1513, %v1509
    %v1516 = vld [vmem:[%s1] sm:$0x3]
    %v1517 = vmul.f32 %v1509, 0.5
    %v1518 = vmul.f32 %v1517, 1.442695
    %v1519 = vpow.pop %v1518
    %v1520 = vmul.f32 %v1516, %v1519
    %v1521 = vadd.f32 %v1507, %v1520
    %v1522 = vpack.c.bf16 %v1521, %v1521
    %v1523 = vld [vmem:[%s6] sm:$0xff]
    %v1524 = vld [vmem:[%s6 + $0x8] sm:$0xff]
    %v1525 = vld [vmem:[%s6 + $0x10] sm:$0xff]
    %v1526 = vld [vmem:[%s6 + $0x18] sm:$0xff]
    %v1527 = vld [vmem:[%s6 + $0x20] sm:$0x33]
    %v1528 = vld [vmem:[%s6 + $0x28] sm:$0x33]
    %v1529 = vld [vmem:[%s7] sm:$0xf]
    %v1531 = vlaneseq
    %v1532 = vshrl.u32 %v1531, 7
    %v1533 = vsub.s32 0, %v1532
    %v1534 = vrot.slane %v1529, %v1533
    %v1535 = vlaneseq
    %v1536 = vshrl.u32 %v1535, 7
    %v1537 = vsub.s32 1, %v1536
    %v1538 = vrot.slane %v1529, %v1537
    %v1539 = vlaneseq
    %v1540 = vshrl.u32 %v1539, 7
    %v1541 = vsub.s32 2, %v1540
    %v1542 = vrot.slane %v1529, %v1541
    %v1543 = vlaneseq
    %v1544 = vshrl.u32 %v1543, 7
    %v1545 = vsub.s32 3, %v1544
    %v1546 = vrot.slane %v1529, %v1545
    %v1557 = vunpack.c.l.b16 %v1523
    %v1558 = vunpack.c.h.b16 %v1523
    %v1559 = vunpack.c.l.b16 %v1524
    %v1560 = vunpack.c.h.b16 %v1524
    %v1561 = vunpack.c.l.b16 %v1525
    %v1562 = vunpack.c.h.b16 %v1525
    %v1563 = vunpack.c.l.b16 %v1526
    %v1564 = vunpack.c.h.b16 %v1526
    %v1565 = vunpack.c.l.b16 %v1527
    %v1566 = vunpack.c.h.b16 %v1527
    %v1567 = vunpack.c.l.b16 %v1528
    %v1568 = vunpack.c.h.b16 %v1528
    %v1569 = vpack.c.b16 %v1561, %v1557
    %v1570 = vpack.c.b16 %v1562, %v1558
    %v1571 = vpack.c.b16 %v1563, %v1559
    %v1572 = vpack.c.b16 %v1564, %v1560
    %v1573 = vpack.c.b16 %v1565, %v1565
    %v1574 = vpack.c.b16 %v1566, %v1566
    %v1575 = vpack.c.b16 %v1567, %v1567
    %v1576 = vpack.c.b16 %v1568, %v1568
    %vm1581 = vcmask 162816
    %v1583 = vsel %vm1581, %v1522, 0
    %v1586 = vsel %vm850, %v1573, 0
    %v1589 = vsel %vm850, %v1574, 0
    %v1592 = vsel %vm850, %v1575, 0
    %v1595 = vsel %vm850, %v1576, 0
    %1597 = vmatprep.subr.bf16.mxu0 %v1570
    %1598 = vmatpush1.bf16.msra.mxu0 %v1569
    %1599 = vmatprep.subr.bf16.mxu0 %v1589
    %1600 = vmatpush1.bf16.msra.mxu0 %v1586
    %1601 = vmatprep.subr.bf16.mxu0 0
    %1602 = vmatpush1.bf16.msra.mxu0 0
    %1603 = vmatprep.subr.bf16.mxu0 0
    %1604 = vmatpush1.bf16.msra.mxu0 0
    %1605 = vmatprep.subr.bf16.mxu0 0
    %1606 = vmatpush1.bf16.msra.mxu0 0
    %1607 = vmatprep.subr.bf16.mxu0 0
    %1608 = vmatpush1.bf16.msra.mxu0 0
    %1609 = vmatprep.subr.bf16.mxu0 0
    %1610 = vmatpush1.bf16.msra.mxu0 0
    %1611 = vmatprep.subr.bf16.mxu0 0
    %1612 = vmatpush1.bf16.msra.mxu0 0
    %1613 = vmatprep.subr.bf16.mxu0 0
    %1614 = vmatpush1.bf16.msra.mxu0 0
    %1615 = vmatprep.subr.bf16.mxu0 0
    %1616 = vmatpush1.bf16.msra.mxu0 0
    %1617 = vmatprep.subr.bf16.mxu0 0
    %1618 = vmatpush1.bf16.msra.mxu0 0
    %1619 = vmatprep.subr.bf16.mxu0 0
    %1620 = vmatpush1.bf16.msra.mxu0 0
    %1621 = vmatprep.subr.bf16.mxu0 0
    %1622 = vmatpush1.bf16.msra.mxu0 0
    %1623 = vmatprep.subr.bf16.mxu0 0
    %1624 = vmatpush1.bf16.msra.mxu0 0
    %1625 = vmatprep.subr.bf16.mxu0 0
    %1626 = vmatpush1.bf16.msra.mxu0 0
    %1627 = vmatprep.subr.bf16.mxu0 0
    %1628 = vmatpush1.bf16.msra.mxu0 0
    %1629 = vmatprep.mubr.bf16.mxu0 0
    %1630 = vmatmul.mubr.bf16.gmra.mrb[0].mxu0 %v1583
    %v1631 = vpop.f32.mrb[0].mxu0
    %v1632 = vadd.f32 %v1534, %v1631
    %v1633 = vpop.f32.mrb[0].mxu0
    %v1634 = vadd.f32 %v1538, %v1633
    %v1635 = vpop.f32.mrb[0].mxu0
    %v1636 = vpop.f32.mrb[0].mxu0
    %1637 = vdwg.mxu0
    %1638 = vmatprep.subr.bf16.mxu0 %v1572
    %1639 = vmatpush1.bf16.msra.mxu0 %v1571
    %1640 = vmatprep.subr.bf16.mxu0 %v1595
    %1641 = vmatpush1.bf16.msra.mxu0 %v1592
    %1642 = vmatprep.subr.bf16.mxu0 0
    %1643 = vmatpush1.bf16.msra.mxu0 0
    %1644 = vmatprep.subr.bf16.mxu0 0
    %1645 = vmatpush1.bf16.msra.mxu0 0
    %1646 = vmatprep.subr.bf16.mxu0 0
    %1647 = vmatpush1.bf16.msra.mxu0 0
    %1648 = vmatprep.subr.bf16.mxu0 0
    %1649 = vmatpush1.bf16.msra.mxu0 0
    %1650 = vmatprep.subr.bf16.mxu0 0
    %1651 = vmatpush1.bf16.msra.mxu0 0
    %1652 = vmatprep.subr.bf16.mxu0 0
    %1653 = vmatpush1.bf16.msra.mxu0 0
    %1654 = vmatprep.subr.bf16.mxu0 0
    %1655 = vmatpush1.bf16.msra.mxu0 0
    %1656 = vmatprep.subr.bf16.mxu0 0
    %1657 = vmatpush1.bf16.msra.mxu0 0
    %1658 = vmatprep.subr.bf16.mxu0 0
    %1659 = vmatpush1.bf16.msra.mxu0 0
    %1660 = vmatprep.subr.bf16.mxu0 0
    %1661 = vmatpush1.bf16.msra.mxu0 0
    %1662 = vmatprep.subr.bf16.mxu0 0
    %1663 = vmatpush1.bf16.msra.mxu0 0
    %1664 = vmatprep.subr.bf16.mxu0 0
    %1665 = vmatpush1.bf16.msra.mxu0 0
    %1666 = vmatprep.subr.bf16.mxu0 0
    %1667 = vmatpush1.bf16.msra.mxu0 0
    %1668 = vmatprep.subr.bf16.mxu0 0
    %1669 = vmatpush1.bf16.msra.mxu0 0
    %1670 = vmatprep.mubr.bf16.mxu0 0
    %1671 = vmatmul.mubr.bf16.gmra.mrb[0].mxu0 %v1583
    %v1672 = vpop.f32.mrb[0].mxu0
    %v1673 = vadd.f32 %v1542, %v1672
    %v1674 = vpop.f32.mrb[0].mxu0
    %v1675 = vadd.f32 %v1546, %v1674
    %v1676 = vpop.f32.mrb[0].mxu0
    %v1677 = vpop.f32.mrb[0].mxu0
    %1678 = vdwg.mxu0
    %v1679 = vmax.f32 %v1632, 0.0
    %v1680 = vmax.f32 %v1634, 0.0
    %v1681 = vmax.f32 %v1673, 0.0
    %v1682 = vmax.f32 %v1675, 0.0
    %v1683 = vpack.c.bf16 %v1679, %v1679
    %v1684 = vpack.c.bf16 %v1680, %v1680
    %v1685 = vpack.c.bf16 %v1681, %v1681
    %v1686 = vpack.c.bf16 %v1682, %v1682
    %v1687 = vld [vmem:[%s8] sm:$0xff]
    %v1688 = vld [vmem:[%s8 + $0x8] sm:$0xff]
    %v1689 = vld [vmem:[%s8 + $0x10] sm:$0xff]
    %v1690 = vld [vmem:[%s8 + $0x18] sm:$0xff]
    %v1691 = vld [vmem:[%s8 + $0x20] sm:$0xff]
    %v1692 = vld [vmem:[%s8 + $0x28] sm:$0xff]
    %v1693 = vld [vmem:[%s8 + $0x30] sm:$0xff]
    %v1694 = vld [vmem:[%s8 + $0x38] sm:$0xff]
    %v1695 = vld [vmem:[%s8 + $0x40] sm:$0xff]
    %v1696 = vld [vmem:[%s8 + $0x48] sm:$0xff]
    %v1697 = vld [vmem:[%s8 + $0x50] sm:$0xff]
    %v1698 = vld [vmem:[%s8 + $0x58] sm:$0xff]
    %v1699 = vld [vmem:[%s8 + $0x60] sm:$0xff]
    %v1700 = vld [vmem:[%s8 + $0x68] sm:$0xff]
    %v1701 = vld [vmem:[%s8 + $0x70] sm:$0xff]
    %v1702 = vld [vmem:[%s8 + $0x78] sm:$0xff]
    %v1703 = vld [vmem:[%s8 + $0x80] sm:$0xff]
    %v1704 = vld [vmem:[%s8 + $0x88] sm:$0xff]
    %v1705 = vld [vmem:[%s8 + $0x90] sm:$0xff]
    %v1706 = vld [vmem:[%s8 + $0x98] sm:$0xff]
    %v1707 = vld [vmem:[%s8 + $0xa0] sm:$0xff]
    %v1708 = vld [vmem:[%s8 + $0xa8] sm:$0xff]
    %v1709 = vld [vmem:[%s8 + $0xb0] sm:$0xff]
    %v1710 = vld [vmem:[%s8 + $0xb8] sm:$0xff]
    %v1711 = vld [vmem:[%s8 + $0xc0] sm:$0xff]
    %v1712 = vld [vmem:[%s8 + $0xc8] sm:$0xff]
    %v1713 = vld [vmem:[%s8 + $0xd0] sm:$0xff]
    %v1714 = vld [vmem:[%s8 + $0xd8] sm:$0xff]
    %v1715 = vld [vmem:[%s8 + $0xe0] sm:$0xff]
    %v1716 = vld [vmem:[%s8 + $0xe8] sm:$0xff]
    %v1717 = vld [vmem:[%s8 + $0xf0] sm:$0xff]
    %v1718 = vld [vmem:[%s8 + $0xf8] sm:$0xff]
    %v1719 = vld [vmem:[%s8 + $0x100] sm:$0xff]
    %v1720 = vld [vmem:[%s8 + $0x108] sm:$0xff]
    %v1721 = vld [vmem:[%s8 + $0x110] sm:$0xff]
    %v1722 = vld [vmem:[%s8 + $0x118] sm:$0xff]
    %v1723 = vld [vmem:[%s8 + $0x120] sm:$0xff]
    %v1724 = vld [vmem:[%s8 + $0x128] sm:$0xff]
    %v1725 = vld [vmem:[%s8 + $0x130] sm:$0xff]
    %v1726 = vld [vmem:[%s8 + $0x138] sm:$0xff]
    %v1727 = vld [vmem:[%s8 + $0x140] sm:$0xff]
    %v1728 = vld [vmem:[%s8 + $0x148] sm:$0xff]
    %v1729 = vld [vmem:[%s8 + $0x150] sm:$0xff]
    %v1730 = vld [vmem:[%s8 + $0x158] sm:$0xff]
    %v1731 = vld [vmem:[%s8 + $0x160] sm:$0xff]
    %v1732 = vld [vmem:[%s8 + $0x168] sm:$0xff]
    %v1733 = vld [vmem:[%s8 + $0x170] sm:$0xff]
    %v1734 = vld [vmem:[%s8 + $0x178] sm:$0xff]
    %v1735 = vld [vmem:[%s8 + $0x180] sm:$0xff]
    %v1736 = vld [vmem:[%s8 + $0x188] sm:$0xff]
    %v1737 = vld [vmem:[%s8 + $0x190] sm:$0xff]
    %v1738 = vld [vmem:[%s8 + $0x198] sm:$0xff]
    %v1739 = vld [vmem:[%s8 + $0x1a0] sm:$0xff]
    %v1740 = vld [vmem:[%s8 + $0x1a8] sm:$0xff]
    %v1741 = vld [vmem:[%s8 + $0x1b0] sm:$0xff]
    %v1742 = vld [vmem:[%s8 + $0x1b8] sm:$0xff]
    %v1743 = vld [vmem:[%s8 + $0x1c0] sm:$0xff]
    %v1744 = vld [vmem:[%s8 + $0x1c8] sm:$0xff]
    %v1745 = vld [vmem:[%s8 + $0x1d0] sm:$0xff]
    %v1746 = vld [vmem:[%s8 + $0x1d8] sm:$0xff]
    %v1747 = vld [vmem:[%s8 + $0x1e0] sm:$0xff]
    %v1748 = vld [vmem:[%s8 + $0x1e8] sm:$0xff]
    %v1749 = vld [vmem:[%s8 + $0x1f0] sm:$0xff]
    %v1750 = vld [vmem:[%s8 + $0x1f8] sm:$0xff]
    %v1751 = vld [vmem:[%s8 + $0x200] sm:$0xff]
    %v1752 = vld [vmem:[%s8 + $0x208] sm:$0xff]
    %v1753 = vld [vmem:[%s8 + $0x210] sm:$0xff]
    %v1754 = vld [vmem:[%s8 + $0x218] sm:$0xff]
    %v1755 = vld [vmem:[%s8 + $0x220] sm:$0xff]
    %v1756 = vld [vmem:[%s8 + $0x228] sm:$0xff]
    %v1757 = vld [vmem:[%s8 + $0x230] sm:$0xff]
    %v1758 = vld [vmem:[%s8 + $0x238] sm:$0xff]
    %v1759 = vld [vmem:[%s8 + $0x240] sm:$0xff]
    %v1760 = vld [vmem:[%s8 + $0x248] sm:$0xff]
    %v1761 = vld [vmem:[%s8 + $0x250] sm:$0xff]
    %v1762 = vld [vmem:[%s8 + $0x258] sm:$0xff]
    %v1763 = vld [vmem:[%s8 + $0x260] sm:$0xff]
    %v1764 = vld [vmem:[%s8 + $0x268] sm:$0xff]
    %v1765 = vld [vmem:[%s8 + $0x270] sm:$0xff]
    %v1766 = vld [vmem:[%s8 + $0x278] sm:$0xff]
    %v1767 = vld [vmem:[%s8 + $0x280] sm:$0xff]
    %v1768 = vld [vmem:[%s8 + $0x288] sm:$0xff]
    %v1769 = vld [vmem:[%s8 + $0x290] sm:$0xff]
    %v1770 = vld [vmem:[%s8 + $0x298] sm:$0xff]
    %v1771 = vld [vmem:[%s8 + $0x2a0] sm:$0xff]
    %v1772 = vld [vmem:[%s8 + $0x2a8] sm:$0xff]
    %v1773 = vld [vmem:[%s8 + $0x2b0] sm:$0xff]
    %v1774 = vld [vmem:[%s8 + $0x2b8] sm:$0xff]
    %v1775 = vld [vmem:[%s8 + $0x2c0] sm:$0xff]
    %v1776 = vld [vmem:[%s8 + $0x2c8] sm:$0xff]
    %v1777 = vld [vmem:[%s8 + $0x2d0] sm:$0xff]
    %v1778 = vld [vmem:[%s8 + $0x2d8] sm:$0xff]
    %v1779 = vld [vmem:[%s8 + $0x2e0] sm:$0xff]
    %v1780 = vld [vmem:[%s8 + $0x2e8] sm:$0xff]
    %v1781 = vld [vmem:[%s8 + $0x2f0] sm:$0xff]
    %v1782 = vld [vmem:[%s8 + $0x2f8] sm:$0xff]
    %v1783 = vld [vmem:[%s8 + $0x300] sm:$0xff]
    %v1784 = vld [vmem:[%s8 + $0x308] sm:$0xff]
    %v1785 = vld [vmem:[%s8 + $0x310] sm:$0xff]
    %v1786 = vld [vmem:[%s8 + $0x318] sm:$0xff]
    %v1787 = vld [vmem:[%s8 + $0x320] sm:$0xff]
    %v1788 = vld [vmem:[%s8 + $0x328] sm:$0xff]
    %v1789 = vld [vmem:[%s8 + $0x330] sm:$0xff]
    %v1790 = vld [vmem:[%s8 + $0x338] sm:$0xff]
    %v1791 = vld [vmem:[%s8 + $0x340] sm:$0xff]
    %v1792 = vld [vmem:[%s8 + $0x348] sm:$0xff]
    %v1793 = vld [vmem:[%s8 + $0x350] sm:$0xff]
    %v1794 = vld [vmem:[%s8 + $0x358] sm:$0xff]
    %v1795 = vld [vmem:[%s8 + $0x360] sm:$0xff]
    %v1796 = vld [vmem:[%s8 + $0x368] sm:$0xff]
    %v1797 = vld [vmem:[%s8 + $0x370] sm:$0xff]
    %v1798 = vld [vmem:[%s8 + $0x378] sm:$0xff]
    %v1799 = vld [vmem:[%s8 + $0x380] sm:$0xff]
    %v1800 = vld [vmem:[%s8 + $0x388] sm:$0xff]
    %v1801 = vld [vmem:[%s8 + $0x390] sm:$0xff]
    %v1802 = vld [vmem:[%s8 + $0x398] sm:$0xff]
    %v1803 = vld [vmem:[%s8 + $0x3a0] sm:$0xff]
    %v1804 = vld [vmem:[%s8 + $0x3a8] sm:$0xff]
    %v1805 = vld [vmem:[%s8 + $0x3b0] sm:$0xff]
    %v1806 = vld [vmem:[%s8 + $0x3b8] sm:$0xff]
    %v1807 = vld [vmem:[%s8 + $0x3c0] sm:$0xff]
    %v1808 = vld [vmem:[%s8 + $0x3c8] sm:$0xff]
    %v1809 = vld [vmem:[%s8 + $0x3d0] sm:$0xff]
    %v1810 = vld [vmem:[%s8 + $0x3d8] sm:$0xff]
    %v1811 = vld [vmem:[%s8 + $0x3e0] sm:$0xff]
    %v1812 = vld [vmem:[%s8 + $0x3e8] sm:$0xff]
    %v1813 = vld [vmem:[%s8 + $0x3f0] sm:$0xff]
    %v1814 = vld [vmem:[%s8 + $0x3f8] sm:$0xff]
    %v1815 = vld [vmem:[%s9] sm:$0xf]
    %v1817 = vlaneseq
    %v1818 = vshrl.u32 %v1817, 7
    %v1819 = vsub.s32 0, %v1818
    %v1820 = vrot.slane %v1815, %v1819
    %v1821 = vlaneseq
    %v1822 = vshrl.u32 %v1821, 7
    %v1823 = vsub.s32 1, %v1822
    %v1824 = vrot.slane %v1815, %v1823
    %v1825 = vlaneseq
    %v1826 = vshrl.u32 %v1825, 7
    %v1827 = vsub.s32 2, %v1826
    %v1828 = vrot.slane %v1815, %v1827
    %v1829 = vlaneseq
    %v1830 = vshrl.u32 %v1829, 7
    %v1831 = vsub.s32 3, %v1830
    %v1832 = vrot.slane %v1815, %v1831
    %v1965 = vunpack.c.l.b16 %v1687
    %v1966 = vunpack.c.h.b16 %v1687
    %v1967 = vunpack.c.l.b16 %v1688
    %v1968 = vunpack.c.h.b16 %v1688
    %v1969 = vunpack.c.l.b16 %v1689
    %v1970 = vunpack.c.h.b16 %v1689
    %v1971 = vunpack.c.l.b16 %v1690
    %v1972 = vunpack.c.h.b16 %v1690
    %v1973 = vunpack.c.l.b16 %v1691
    %v1974 = vunpack.c.h.b16 %v1691
    %v1975 = vunpack.c.l.b16 %v1692
    %v1976 = vunpack.c.h.b16 %v1692
    %v1977 = vunpack.c.l.b16 %v1693
    %v1978 = vunpack.c.h.b16 %v1693
    %v1979 = vunpack.c.l.b16 %v1694
    %v1980 = vunpack.c.h.b16 %v1694
    %v1981 = vunpack.c.l.b16 %v1695
    %v1982 = vunpack.c.h.b16 %v1695
    %v1983 = vunpack.c.l.b16 %v1696
    %v1984 = vunpack.c.h.b16 %v1696
    %v1985 = vunpack.c.l.b16 %v1697
    %v1986 = vunpack.c.h.b16 %v1697
    %v1987 = vunpack.c.l.b16 %v1698
    %v1988 = vunpack.c.h.b16 %v1698
    %v1989 = vunpack.c.l.b16 %v1699
    %v1990 = vunpack.c.h.b16 %v1699
    %v1991 = vunpack.c.l.b16 %v1700
    %v1992 = vunpack.c.h.b16 %v1700
    %v1993 = vunpack.c.l.b16 %v1701
    %v1994 = vunpack.c.h.b16 %v1701
    %v1995 = vunpack.c.l.b16 %v1702
    %v1996 = vunpack.c.h.b16 %v1702
    %v1997 = vunpack.c.l.b16 %v1703
    %v1998 = vunpack.c.h.b16 %v1703
    %v1999 = vunpack.c.l.b16 %v1704
    %v2000 = vunpack.c.h.b16 %v1704
    %v2001 = vunpack.c.l.b16 %v1705
    %v2002 = vunpack.c.h.b16 %v1705
    %v2003 = vunpack.c.l.b16 %v1706
    %v2004 = vunpack.c.h.b16 %v1706
    %v2005 = vunpack.c.l.b16 %v1707
    %v2006 = vunpack.c.h.b16 %v1707
    %v2007 = vunpack.c.l.b16 %v1708
    %v2008 = vunpack.c.h.b16 %v1708
    %v2009 = vunpack.c.l.b16 %v1709
    %v2010 = vunpack.c.h.b16 %v1709
    %v2011 = vunpack.c.l.b16 %v1710
    %v2012 = vunpack.c.h.b16 %v1710
    %v2013 = vunpack.c.l.b16 %v1711
    %v2014 = vunpack.c.h.b16 %v1711
    %v2015 = vunpack.c.l.b16 %v1712
    %v2016 = vunpack.c.h.b16 %v1712
    %v2017 = vunpack.c.l.b16 %v1713
    %v2018 = vunpack.c.h.b16 %v1713
    %v2019 = vunpack.c.l.b16 %v1714
    %v2020 = vunpack.c.h.b16 %v1714
    %v2021 = vunpack.c.l.b16 %v1715
    %v2022 = vunpack.c.h.b16 %v1715
    %v2023 = vunpack.c.l.b16 %v1716
    %v2024 = vunpack.c.h.b16 %v1716
    %v2025 = vunpack.c.l.b16 %v1717
    %v2026 = vunpack.c.h.b16 %v1717
    %v2027 = vunpack.c.l.b16 %v1718
    %v2028 = vunpack.c.h.b16 %v1718
    %v2029 = vunpack.c.l.b16 %v1719
    %v2030 = vunpack.c.h.b16 %v1719
    %v2031 = vunpack.c.l.b16 %v1720
    %v2032 = vunpack.c.h.b16 %v1720
    %v2033 = vunpack.c.l.b16 %v1721
    %v2034 = vunpack.c.h.b16 %v1721
    %v2035 = vunpack.c.l.b16 %v1722
    %v2036 = vunpack.c.h.b16 %v1722
    %v2037 = vunpack.c.l.b16 %v1723
    %v2038 = vunpack.c.h.b16 %v1723
    %v2039 = vunpack.c.l.b16 %v1724
    %v2040 = vunpack.c.h.b16 %v1724
    %v2041 = vunpack.c.l.b16 %v1725
    %v2042 = vunpack.c.h.b16 %v1725
    %v2043 = vunpack.c.l.b16 %v1726
    %v2044 = vunpack.c.h.b16 %v1726
    %v2045 = vunpack.c.l.b16 %v1727
    %v2046 = vunpack.c.h.b16 %v1727
    %v2047 = vunpack.c.l.b16 %v1728
    %v2048 = vunpack.c.h.b16 %v1728
    %v2049 = vunpack.c.l.b16 %v1729
    %v2050 = vunpack.c.h.b16 %v1729
    %v2051 = vunpack.c.l.b16 %v1730
    %v2052 = vunpack.c.h.b16 %v1730
    %v2053 = vunpack.c.l.b16 %v1731
    %v2054 = vunpack.c.h.b16 %v1731
    %v2055 = vunpack.c.l.b16 %v1732
    %v2056 = vunpack.c.h.b16 %v1732
    %v2057 = vunpack.c.l.b16 %v1733
    %v2058 = vunpack.c.h.b16 %v1733
    %v2059 = vunpack.c.l.b16 %v1734
    %v2060 = vunpack.c.h.b16 %v1734
    %v2061 = vunpack.c.l.b16 %v1735
    %v2062 = vunpack.c.h.b16 %v1735
    %v2063 = vunpack.c.l.b16 %v1736
    %v2064 = vunpack.c.h.b16 %v1736
    %v2065 = vunpack.c.l.b16 %v1737
    %v2066 = vunpack.c.h.b16 %v1737
    %v2067 = vunpack.c.l.b16 %v1738
    %v2068 = vunpack.c.h.b16 %v1738
    %v2069 = vunpack.c.l.b16 %v1739
    %v2070 = vunpack.c.h.b16 %v1739
    %v2071 = vunpack.c.l.b16 %v1740
    %v2072 = vunpack.c.h.b16 %v1740
    %v2073 = vunpack.c.l.b16 %v1741
    %v2074 = vunpack.c.h.b16 %v1741
    %v2075 = vunpack.c.l.b16 %v1742
    %v2076 = vunpack.c.h.b16 %v1742
    %v2077 = vunpack.c.l.b16 %v1743
    %v2078 = vunpack.c.h.b16 %v1743
    %v2079 = vunpack.c.l.b16 %v1744
    %v2080 = vunpack.c.h.b16 %v1744
    %v2081 = vunpack.c.l.b16 %v1745
    %v2082 = vunpack.c.h.b16 %v1745
    %v2083 = vunpack.c.l.b16 %v1746
    %v2084 = vunpack.c.h.b16 %v1746
    %v2085 = vunpack.c.l.b16 %v1747
    %v2086 = vunpack.c.h.b16 %v1747
    %v2087 = vunpack.c.l.b16 %v1748
    %v2088 = vunpack.c.h.b16 %v1748
    %v2089 = vunpack.c.l.b16 %v1749
    %v2090 = vunpack.c.h.b16 %v1749
    %v2091 = vunpack.c.l.b16 %v1750
    %v2092 = vunpack.c.h.b16 %v1750
    %v2093 = vunpack.c.l.b16 %v1751
    %v2094 = vunpack.c.h.b16 %v1751
    %v2095 = vunpack.c.l.b16 %v1752
    %v2096 = vunpack.c.h.b16 %v1752
    %v2097 = vunpack.c.l.b16 %v1753
    %v2098 = vunpack.c.h.b16 %v1753
    %v2099 = vunpack.c.l.b16 %v1754
    %v2100 = vunpack.c.h.b16 %v1754
    %v2101 = vunpack.c.l.b16 %v1755
    %v2102 = vunpack.c.h.b16 %v1755
    %v2103 = vunpack.c.l.b16 %v1756
    %v2104 = vunpack.c.h.b16 %v1756
    %v2105 = vunpack.c.l.b16 %v1757
    %v2106 = vunpack.c.h.b16 %v1757
    %v2107 = vunpack.c.l.b16 %v1758
    %v2108 = vunpack.c.h.b16 %v1758
    %v2109 = vunpack.c.l.b16 %v1759
    %v2110 = vunpack.c.h.b16 %v1759
    %v2111 = vunpack.c.l.b16 %v1760
    %v2112 = vunpack.c.h.b16 %v1760
    %v2113 = vunpack.c.l.b16 %v1761
    %v2114 = vunpack.c.h.b16 %v1761
    %v2115 = vunpack.c.l.b16 %v1762
    %v2116 = vunpack.c.h.b16 %v1762
    %v2117 = vunpack.c.l.b16 %v1763
    %v2118 = vunpack.c.h.b16 %v1763
    %v2119 = vunpack.c.l.b16 %v1764
    %v2120 = vunpack.c.h.b16 %v1764
    %v2121 = vunpack.c.l.b16 %v1765
    %v2122 = vunpack.c.h.b16 %v1765
    %v2123 = vunpack.c.l.b16 %v1766
    %v2124 = vunpack.c.h.b16 %v1766
    %v2125 = vunpack.c.l.b16 %v1767
    %v2126 = vunpack.c.h.b16 %v1767
    %v2127 = vunpack.c.l.b16 %v1768
    %v2128 = vunpack.c.h.b16 %v1768
    %v2129 = vunpack.c.l.b16 %v1769
    %v2130 = vunpack.c.h.b16 %v1769
    %v2131 = vunpack.c.l.b16 %v1770
    %v2132 = vunpack.c.h.b16 %v1770
    %v2133 = vunpack.c.l.b16 %v1771
    %v2134 = vunpack.c.h.b16 %v1771
    %v2135 = vunpack.c.l.b16 %v1772
    %v2136 = vunpack.c.h.b16 %v1772
    %v2137 = vunpack.c.l.b16 %v1773
    %v2138 = vunpack.c.h.b16 %v1773
    %v2139 = vunpack.c.l.b16 %v1774
    %v2140 = vunpack.c.h.b16 %v1774
    %v2141 = vunpack.c.l.b16 %v1775
    %v2142 = vunpack.c.h.b16 %v1775
    %v2143 = vunpack.c.l.b16 %v1776
    %v2144 = vunpack.c.h.b16 %v1776
    %v2145 = vunpack.c.l.b16 %v1777
    %v2146 = vunpack.c.h.b16 %v1777
    %v2147 = vunpack.c.l.b16 %v1778
    %v2148 = vunpack.c.h.b16 %v1778
    %v2149 = vunpack.c.l.b16 %v1779
    %v2150 = vunpack.c.h.b16 %v1779
    %v2151 = vunpack.c.l.b16 %v1780
    %v2152 = vunpack.c.h.b16 %v1780
    %v2153 = vunpack.c.l.b16 %v1781
    %v2154 = vunpack.c.h.b16 %v1781
    %v2155 = vunpack.c.l.b16 %v1782
    %v2156 = vunpack.c.h.b16 %v1782
    %v2157 = vunpack.c.l.b16 %v1783
    %v2158 = vunpack.c.h.b16 %v1783
    %v2159 = vunpack.c.l.b16 %v1784
    %v2160 = vunpack.c.h.b16 %v1784
    %v2161 = vunpack.c.l.b16 %v1785
    %v2162 = vunpack.c.h.b16 %v1785
    %v2163 = vunpack.c.l.b16 %v1786
    %v2164 = vunpack.c.h.b16 %v1786
    %v2165 = vunpack.c.l.b16 %v1787
    %v2166 = vunpack.c.h.b16 %v1787
    %v2167 = vunpack.c.l.b16 %v1788
    %v2168 = vunpack.c.h.b16 %v1788
    %v2169 = vunpack.c.l.b16 %v1789
    %v2170 = vunpack.c.h.b16 %v1789
    %v2171 = vunpack.c.l.b16 %v1790
    %v2172 = vunpack.c.h.b16 %v1790
    %v2173 = vunpack.c.l.b16 %v1791
    %v2174 = vunpack.c.h.b16 %v1791
    %v2175 = vunpack.c.l.b16 %v1792
    %v2176 = vunpack.c.h.b16 %v1792
    %v2177 = vunpack.c.l.b16 %v1793
    %v2178 = vunpack.c.h.b16 %v1793
    %v2179 = vunpack.c.l.b16 %v1794
    %v2180 = vunpack.c.h.b16 %v1794
    %v2181 = vunpack.c.l.b16 %v1795
    %v2182 = vunpack.c.h.b16 %v1795
    %v2183 = vunpack.c.l.b16 %v1796
    %v2184 = vunpack.c.h.b16 %v1796
    %v2185 = vunpack.c.l.b16 %v1797
    %v2186 = vunpack.c.h.b16 %v1797
    %v2187 = vunpack.c.l.b16 %v1798
    %v2188 = vunpack.c.h.b16 %v1798
    %v2189 = vunpack.c.l.b16 %v1799
    %v2190 = vunpack.c.h.b16 %v1799
    %v2191 = vunpack.c.l.b16 %v1800
    %v2192 = vunpack.c.h.b16 %v1800
    %v2193 = vunpack.c.l.b16 %v1801
    %v2194 = vunpack.c.h.b16 %v1801
    %v2195 = vunpack.c.l.b16 %v1802
    %v2196 = vunpack.c.h.b16 %v1802
    %v2197 = vunpack.c.l.b16 %v1803
    %v2198 = vunpack.c.h.b16 %v1803
    %v2199 = vunpack.c.l.b16 %v1804
    %v2200 = vunpack.c.h.b16 %v1804
    %v2201 = vunpack.c.l.b16 %v1805
    %v2202 = vunpack.c.h.b16 %v1805
    %v2203 = vunpack.c.l.b16 %v1806
    %v2204 = vunpack.c.h.b16 %v1806
    %v2205 = vunpack.c.l.b16 %v1807
    %v2206 = vunpack.c.h.b16 %v1807
    %v2207 = vunpack.c.l.b16 %v1808
    %v2208 = vunpack.c.h.b16 %v1808
    %v2209 = vunpack.c.l.b16 %v1809
    %v2210 = vunpack.c.h.b16 %v1809
    %v2211 = vunpack.c.l.b16 %v1810
    %v2212 = vunpack.c.h.b16 %v1810
    %v2213 = vunpack.c.l.b16 %v1811
    %v2214 = vunpack.c.h.b16 %v1811
    %v2215 = vunpack.c.l.b16 %v1812
    %v2216 = vunpack.c.h.b16 %v1812
    %v2217 = vunpack.c.l.b16 %v1813
    %v2218 = vunpack.c.h.b16 %v1813
    %v2219 = vunpack.c.l.b16 %v1814
    %v2220 = vunpack.c.h.b16 %v1814
    %v2221 = vpack.c.b16 %v1969, %v1965
    %v2222 = vpack.c.b16 %v1970, %v1966
    %v2223 = vpack.c.b16 %v1971, %v1967
    %v2224 = vpack.c.b16 %v1972, %v1968
    %v2225 = vpack.c.b16 %v1977, %v1973
    %v2226 = vpack.c.b16 %v1978, %v1974
    %v2227 = vpack.c.b16 %v1979, %v1975
    %v2228 = vpack.c.b16 %v1980, %v1976
    %v2229 = vpack.c.b16 %v1985, %v1981
    %v2230 = vpack.c.b16 %v1986, %v1982
    %v2231 = vpack.c.b16 %v1987, %v1983
    %v2232 = vpack.c.b16 %v1988, %v1984
    %v2233 = vpack.c.b16 %v1993, %v1989
    %v2234 = vpack.c.b16 %v1994, %v1990
    %v2235 = vpack.c.b16 %v1995, %v1991
    %v2236 = vpack.c.b16 %v1996, %v1992
    %v2237 = vpack.c.b16 %v2001, %v1997
    %v2238 = vpack.c.b16 %v2002, %v1998
    %v2239 = vpack.c.b16 %v2003, %v1999
    %v2240 = vpack.c.b16 %v2004, %v2000
    %v2241 = vpack.c.b16 %v2009, %v2005
    %v2242 = vpack.c.b16 %v2010, %v2006
    %v2243 = vpack.c.b16 %v2011, %v2007
    %v2244 = vpack.c.b16 %v2012, %v2008
    %v2245 = vpack.c.b16 %v2017, %v2013
    %v2246 = vpack.c.b16 %v2018, %v2014
    %v2247 = vpack.c.b16 %v2019, %v2015
    %v2248 = vpack.c.b16 %v2020, %v2016
    %v2249 = vpack.c.b16 %v2025, %v2021
    %v2250 = vpack.c.b16 %v2026, %v2022
    %v2251 = vpack.c.b16 %v2027, %v2023
    %v2252 = vpack.c.b16 %v2028, %v2024
    %v2253 = vpack.c.b16 %v2033, %v2029
    %v2254 = vpack.c.b16 %v2034, %v2030
    %v2255 = vpack.c.b16 %v2035, %v2031
    %v2256 = vpack.c.b16 %v2036, %v2032
    %v2257 = vpack.c.b16 %v2041, %v2037
    %v2258 = vpack.c.b16 %v2042, %v2038
    %v2259 = vpack.c.b16 %v2043, %v2039
    %v2260 = vpack.c.b16 %v2044, %v2040
    %v2261 = vpack.c.b16 %v2049, %v2045
    %v2262 = vpack.c.b16 %v2050, %v2046
    %v2263 = vpack.c.b16 %v2051, %v2047
    %v2264 = vpack.c.b16 %v2052, %v2048
    %v2265 = vpack.c.b16 %v2057, %v2053
    %v2266 = vpack.c.b16 %v2058, %v2054
    %v2267 = vpack.c.b16 %v2059, %v2055
    %v2268 = vpack.c.b16 %v2060, %v2056
    %v2269 = vpack.c.b16 %v2065, %v2061
    %v2270 = vpack.c.b16 %v2066, %v2062
    %v2271 = vpack.c.b16 %v2067, %v2063
    %v2272 = vpack.c.b16 %v2068, %v2064
    %v2273 = vpack.c.b16 %v2073, %v2069
    %v2274 = vpack.c.b16 %v2074, %v2070
    %v2275 = vpack.c.b16 %v2075, %v2071
    %v2276 = vpack.c.b16 %v2076, %v2072
    %v2277 = vpack.c.b16 %v2081, %v2077
    %v2278 = vpack.c.b16 %v2082, %v2078
    %v2279 = vpack.c.b16 %v2083, %v2079
    %v2280 = vpack.c.b16 %v2084, %v2080
    %v2281 = vpack.c.b16 %v2089, %v2085
    %v2282 = vpack.c.b16 %v2090, %v2086
    %v2283 = vpack.c.b16 %v2091, %v2087
    %v2284 = vpack.c.b16 %v2092, %v2088
    %v2285 = vpack.c.b16 %v2097, %v2093
    %v2286 = vpack.c.b16 %v2098, %v2094
    %v2287 = vpack.c.b16 %v2099, %v2095
    %v2288 = vpack.c.b16 %v2100, %v2096
    %v2289 = vpack.c.b16 %v2105, %v2101
    %v2290 = vpack.c.b16 %v2106, %v2102
    %v2291 = vpack.c.b16 %v2107, %v2103
    %v2292 = vpack.c.b16 %v2108, %v2104
    %v2293 = vpack.c.b16 %v2113, %v2109
    %v2294 = vpack.c.b16 %v2114, %v2110
    %v2295 = vpack.c.b16 %v2115, %v2111
    %v2296 = vpack.c.b16 %v2116, %v2112
    %v2297 = vpack.c.b16 %v2121, %v2117
    %v2298 = vpack.c.b16 %v2122, %v2118
    %v2299 = vpack.c.b16 %v2123, %v2119
    %v2300 = vpack.c.b16 %v2124, %v2120
    %v2301 = vpack.c.b16 %v2129, %v2125
    %v2302 = vpack.c.b16 %v2130, %v2126
    %v2303 = vpack.c.b16 %v2131, %v2127
    %v2304 = vpack.c.b16 %v2132, %v2128
    %v2305 = vpack.c.b16 %v2137, %v2133
    %v2306 = vpack.c.b16 %v2138, %v2134
    %v2307 = vpack.c.b16 %v2139, %v2135
    %v2308 = vpack.c.b16 %v2140, %v2136
    %v2309 = vpack.c.b16 %v2145, %v2141
    %v2310 = vpack.c.b16 %v2146, %v2142
    %v2311 = vpack.c.b16 %v2147, %v2143
    %v2312 = vpack.c.b16 %v2148, %v2144
    %v2313 = vpack.c.b16 %v2153, %v2149
    %v2314 = vpack.c.b16 %v2154, %v2150
    %v2315 = vpack.c.b16 %v2155, %v2151
    %v2316 = vpack.c.b16 %v2156, %v2152
    %v2317 = vpack.c.b16 %v2161, %v2157
    %v2318 = vpack.c.b16 %v2162, %v2158
    %v2319 = vpack.c.b16 %v2163, %v2159
    %v2320 = vpack.c.b16 %v2164, %v2160
    %v2321 = vpack.c.b16 %v2169, %v2165
    %v2322 = vpack.c.b16 %v2170, %v2166
    %v2323 = vpack.c.b16 %v2171, %v2167
    %v2324 = vpack.c.b16 %v2172, %v2168
    %v2325 = vpack.c.b16 %v2177, %v2173
    %v2326 = vpack.c.b16 %v2178, %v2174
    %v2327 = vpack.c.b16 %v2179, %v2175
    %v2328 = vpack.c.b16 %v2180, %v2176
    %v2329 = vpack.c.b16 %v2185, %v2181
    %v2330 = vpack.c.b16 %v2186, %v2182
    %v2331 = vpack.c.b16 %v2187, %v2183
    %v2332 = vpack.c.b16 %v2188, %v2184
    %v2333 = vpack.c.b16 %v2193, %v2189
    %v2334 = vpack.c.b16 %v2194, %v2190
    %v2335 = vpack.c.b16 %v2195, %v2191
    %v2336 = vpack.c.b16 %v2196, %v2192
    %v2337 = vpack.c.b16 %v2201, %v2197
    %v2338 = vpack.c.b16 %v2202, %v2198
    %v2339 = vpack.c.b16 %v2203, %v2199
    %v2340 = vpack.c.b16 %v2204, %v2200
    %v2341 = vpack.c.b16 %v2209, %v2205
    %v2342 = vpack.c.b16 %v2210, %v2206
    %v2343 = vpack.c.b16 %v2211, %v2207
    %v2344 = vpack.c.b16 %v2212, %v2208
    %v2345 = vpack.c.b16 %v2217, %v2213
    %v2346 = vpack.c.b16 %v2218, %v2214
    %v2347 = vpack.c.b16 %v2219, %v2215
    %v2348 = vpack.c.b16 %v2220, %v2216
    %2477 = vmatprep.subr.bf16.mxu0 %v2222
    %2478 = vmatpush1.bf16.msra.mxu0 %v2221
    %2479 = vmatprep.subr.bf16.mxu0 %v2226
    %2480 = vmatpush1.bf16.msra.mxu0 %v2225
    %2481 = vmatprep.subr.bf16.mxu0 %v2230
    %2482 = vmatpush1.bf16.msra.mxu0 %v2229
    %2483 = vmatprep.subr.bf16.mxu0 %v2234
    %2484 = vmatpush1.bf16.msra.mxu0 %v2233
    %2485 = vmatprep.subr.bf16.mxu0 %v2238
    %2486 = vmatpush1.bf16.msra.mxu0 %v2237
    %2487 = vmatprep.subr.bf16.mxu0 %v2242
    %2488 = vmatpush1.bf16.msra.mxu0 %v2241
    %2489 = vmatprep.subr.bf16.mxu0 %v2246
    %2490 = vmatpush1.bf16.msra.mxu0 %v2245
    %2491 = vmatprep.subr.bf16.mxu0 %v2250
    %2492 = vmatpush1.bf16.msra.mxu0 %v2249
    %2493 = vmatprep.subr.bf16.mxu0 %v2254
    %2494 = vmatpush1.bf16.msra.mxu0 %v2253
    %2495 = vmatprep.subr.bf16.mxu0 %v2258
    %2496 = vmatpush1.bf16.msra.mxu0 %v2257
    %2497 = vmatprep.subr.bf16.mxu0 %v2262
    %2498 = vmatpush1.bf16.msra.mxu0 %v2261
    %2499 = vmatprep.subr.bf16.mxu0 %v2266
    %2500 = vmatpush1.bf16.msra.mxu0 %v2265
    %2501 = vmatprep.subr.bf16.mxu0 %v2270
    %2502 = vmatpush1.bf16.msra.mxu0 %v2269
    %2503 = vmatprep.subr.bf16.mxu0 %v2274
    %2504 = vmatpush1.bf16.msra.mxu0 %v2273
    %2505 = vmatprep.subr.bf16.mxu0 %v2278
    %2506 = vmatpush1.bf16.msra.mxu0 %v2277
    %2507 = vmatprep.subr.bf16.mxu0 %v2282
    %2508 = vmatpush1.bf16.msra.mxu0 %v2281
    %2509 = vmatprep.mubr.bf16.mxu0 %v1684
    %2510 = vmatmul.mubr.bf16.gmra.mrb[0].mxu0 %v1683
    %v2511 = vpop.f32.mrb[0].mxu0
    %v2512 = vadd.f32 %v1820, %v2511
    %v2513 = vpop.f32.mrb[0].mxu0
    %v2514 = vadd.f32 %v1824, %v2513
    %v2515 = vpop.f32.mrb[0].mxu0
    %v2516 = vpop.f32.mrb[0].mxu0
    %2517 = vdwg.mxu0
    %2518 = vmatprep.subr.bf16.mxu0 %v2286
    %2519 = vmatpush1.bf16.msra.mxu0 %v2285
    %2520 = vmatprep.subr.bf16.mxu0 %v2290
    %2521 = vmatpush1.bf16.msra.mxu0 %v2289
    %2522 = vmatprep.subr.bf16.mxu0 %v2294
    %2523 = vmatpush1.bf16.msra.mxu0 %v2293
    %2524 = vmatprep.subr.bf16.mxu0 %v2298
    %2525 = vmatpush1.bf16.msra.mxu0 %v2297
    %2526 = vmatprep.subr.bf16.mxu0 %v2302
    %2527 = vmatpush1.bf16.msra.mxu0 %v2301
    %2528 = vmatprep.subr.bf16.mxu0 %v2306
    %2529 = vmatpush1.bf16.msra.mxu0 %v2305
    %2530 = vmatprep.subr.bf16.mxu0 %v2310
    %2531 = vmatpush1.bf16.msra.mxu0 %v2309
    %2532 = vmatprep.subr.bf16.mxu0 %v2314
    %2533 = vmatpush1.bf16.msra.mxu0 %v2313
    %2534 = vmatprep.subr.bf16.mxu0 %v2318
    %2535 = vmatpush1.bf16.msra.mxu0 %v2317
    %2536 = vmatprep.subr.bf16.mxu0 %v2322
    %2537 = vmatpush1.bf16.msra.mxu0 %v2321
    %2538 = vmatprep.subr.bf16.mxu0 %v2326
    %2539 = vmatpush1.bf16.msra.mxu0 %v2325
    %2540 = vmatprep.subr.bf16.mxu0 %v2330
    %2541 = vmatpush1.bf16.msra.mxu0 %v2329
    %2542 = vmatprep.subr.bf16.mxu0 %v2334
    %2543 = vmatpush1.bf16.msra.mxu0 %v2333
    %2544 = vmatprep.subr.bf16.mxu0 %v2338
    %2545 = vmatpush1.bf16.msra.mxu0 %v2337
    %2546 = vmatprep.subr.bf16.mxu0 %v2342
    %2547 = vmatpush1.bf16.msra.mxu0 %v2341
    %2548 = vmatprep.subr.bf16.mxu0 %v2346
    %2549 = vmatpush1.bf16.msra.mxu0 %v2345
    %2550 = vmatprep.mubr.bf16.mxu0 %v1686
    %2551 = vmatmul.mubr.bf16.gmra.mrb[0].mxu0 %v1685
    %v2552 = vpop.f32.mrb[0].mxu0
    %v2553 = vadd.f32 %v2512, %v2552
    %v2554 = vpop.f32.mrb[0].mxu0
    %v2555 = vadd.f32 %v2514, %v2554
    %v2556 = vpop.f32.mrb[0].mxu0
    %v2557 = vpop.f32.mrb[0].mxu0
    %2558 = vdwg.mxu0
    %2559 = vmatprep.subr.bf16.mxu0 %v2224
    %2560 = vmatpush1.bf16.msra.mxu0 %v2223
    %2561 = vmatprep.subr.bf16.mxu0 %v2228
    %2562 = vmatpush1.bf16.msra.mxu0 %v2227
    %2563 = vmatprep.subr.bf16.mxu0 %v2232
    %2564 = vmatpush1.bf16.msra.mxu0 %v2231
    %2565 = vmatprep.subr.bf16.mxu0 %v2236
    %2566 = vmatpush1.bf16.msra.mxu0 %v2235
    %2567 = vmatprep.subr.bf16.mxu0 %v2240
    %2568 = vmatpush1.bf16.msra.mxu0 %v2239
    %2569 = vmatprep.subr.bf16.mxu0 %v2244
    %2570 = vmatpush1.bf16.msra.mxu0 %v2243
    %2571 = vmatprep.subr.bf16.mxu0 %v2248
    %2572 = vmatpush1.bf16.msra.mxu0 %v2247
    %2573 = vmatprep.subr.bf16.mxu0 %v2252
    %2574 = vmatpush1.bf16.msra.mxu0 %v2251
    %2575 = vmatprep.subr.bf16.mxu0 %v2256
    %2576 = vmatpush1.bf16.msra.mxu0 %v2255
    %2577 = vmatprep.subr.bf16.mxu0 %v2260
    %2578 = vmatpush1.bf16.msra.mxu0 %v2259
    %2579 = vmatprep.subr.bf16.mxu0 %v2264
    %2580 = vmatpush1.bf16.msra.mxu0 %v2263
    %2581 = vmatprep.subr.bf16.mxu0 %v2268
    %2582 = vmatpush1.bf16.msra.mxu0 %v2267
    %2583 = vmatprep.subr.bf16.mxu0 %v2272
    %2584 = vmatpush1.bf16.msra.mxu0 %v2271
    %2585 = vmatprep.subr.bf16.mxu0 %v2276
    %2586 = vmatpush1.bf16.msra.mxu0 %v2275
    %2587 = vmatprep.subr.bf16.mxu0 %v2280
    %2588 = vmatpush1.bf16.msra.mxu0 %v2279
    %2589 = vmatprep.subr.bf16.mxu0 %v2284
    %2590 = vmatpush1.bf16.msra.mxu0 %v2283
    %2591 = vmatprep.mubr.bf16.mxu0 %v1684
    %2592 = vmatmul.mubr.bf16.gmra.mrb[0].mxu0 %v1683
    %v2593 = vpop.f32.mrb[0].mxu0
    %v2594 = vadd.f32 %v1828, %v2593
    %v2595 = vpop.f32.mrb[0].mxu0
    %v2596 = vadd.f32 %v1832, %v2595
    %v2597 = vpop.f32.mrb[0].mxu0
    %v2598 = vpop.f32.mrb[0].mxu0
    %2599 = vdwg.mxu0
    %2600 = vmatprep.subr.bf16.mxu0 %v2288
    %2601 = vmatpush1.bf16.msra.mxu0 %v2287
    %2602 = vmatprep.subr.bf16.mxu0 %v2292
    %2603 = vmatpush1.bf16.msra.mxu0 %v2291
    %2604 = vmatprep.subr.bf16.mxu0 %v2296
    %2605 = vmatpush1.bf16.msra.mxu0 %v2295
    %2606 = vmatprep.subr.bf16.mxu0 %v2300
    %2607 = vmatpush1.bf16.msra.mxu0 %v2299
    %2608 = vmatprep.subr.bf16.mxu0 %v2304
    %2609 = vmatpush1.bf16.msra.mxu0 %v2303
    %2610 = vmatprep.subr.bf16.mxu0 %v2308
    %2611 = vmatpush1.bf16.msra.mxu0 %v2307
    %2612 = vmatprep.subr.bf16.mxu0 %v2312
    %2613 = vmatpush1.bf16.msra.mxu0 %v2311
    %2614 = vmatprep.subr.bf16.mxu0 %v2316
    %2615 = vmatpush1.bf16.msra.mxu0 %v2315
    %2616 = vmatprep.subr.bf16.mxu0 %v2320
    %2617 = vmatpush1.bf16.msra.mxu0 %v2319
    %2618 = vmatprep.subr.bf16.mxu0 %v2324
    %2619 = vmatpush1.bf16.msra.mxu0 %v2323
    %2620 = vmatprep.subr.bf16.mxu0 %v2328
    %2621 = vmatpush1.bf16.msra.mxu0 %v2327
    %2622 = vmatprep.subr.bf16.mxu0 %v2332
    %2623 = vmatpush1.bf16.msra.mxu0 %v2331
    %2624 = vmatprep.subr.bf16.mxu0 %v2336
    %2625 = vmatpush1.bf16.msra.mxu0 %v2335
    %2626 = vmatprep.subr.bf16.mxu0 %v2340
    %2627 = vmatpush1.bf16.msra.mxu0 %v2339
    %2628 = vmatprep.subr.bf16.mxu0 %v2344
    %2629 = vmatpush1.bf16.msra.mxu0 %v2343
    %2630 = vmatprep.subr.bf16.mxu0 %v2348
    %2631 = vmatpush1.bf16.msra.mxu0 %v2347
    %2632 = vmatprep.mubr.bf16.mxu0 %v1686
    %2633 = vmatmul.mubr.bf16.gmra.mrb[0].mxu0 %v1685
    %v2634 = vpop.f32.mrb[0].mxu0
    %v2635 = vadd.f32 %v2594, %v2634
    %v2636 = vpop.f32.mrb[0].mxu0
    %v2637 = vadd.f32 %v2596, %v2636
    %v2638 = vpop.f32.mrb[0].mxu0
    %v2639 = vpop.f32.mrb[0].mxu0
    %2640 = vdwg.mxu0
    %v2641 = vxor.u32 %v2553, 2147483648
    %v2642 = vxor.u32 %v2555, 2147483648
    %v2643 = vxor.u32 %v2635, 2147483648
    %v2644 = vxor.u32 %v2637, 2147483648
    %v2645 = vmul.f32 %v2641, 1.442695
    %v2646 = vpow.pop %v2645
    %v2647 = vmul.f32 %v2642, 1.442695
    %v2648 = vpow.pop %v2647
    %v2649 = vmul.f32 %v2643, 1.442695
    %v2650 = vpow.pop %v2649
    %v2651 = vmul.f32 %v2644, 1.442695
    %v2652 = vpow.pop %v2651
    %v2653 = vadd.f32 %v2646, 1.0
    %v2654 = vadd.f32 %v2648, 1.0
    %v2655 = vadd.f32 %v2650, 1.0
    %v2656 = vadd.f32 %v2652, 1.0
    %v2657 = vrcp.pop %v2653
    %v2658 = vmul.f32 1.0, %v2657
    %v2659 = vrcp.pop %v2654
    %v2660 = vmul.f32 1.0, %v2659
    %v2661 = vrcp.pop %v2655
    %v2662 = vmul.f32 1.0, %v2661
    %v2663 = vrcp.pop %v2656
    %v2664 = vmul.f32 1.0, %v2663
    %v2665 = vpack.c.bf16 %v2658, %v2658
    %v2666 = vpack.c.bf16 %v2660, %v2660
    %v2667 = vpack.c.bf16 %v2662, %v2662
    %v2668 = vpack.c.bf16 %v2664, %v2664
    %v2673 = vcombine.low %v2665, %v2666
    %v2674 = vcombine.low %v2667, %v2668
    %v2676 = vunpack.c.l.s4 1966171168
    %v2677 = vunpack.c.0.s8 %v2676
    %v2678 = vlaneseq
    %v2679 = vshrl.u32 %v2678, 7
    %v2680 = vsub.s32 %v2677, %v2679
    %v2681 = vrot.slane %v2673, %v2680
    %v2683 = vunpack.c.l.s4 1966171168
    %v2684 = vunpack.c.0.s8 %v2683
    %v2685 = vlaneseq
    %v2686 = vshrl.u32 %v2685, 7
    %v2687 = vsub.s32 %v2684, %v2686
    %v2688 = vrot.slane %v2674, %v2687
    %v2689 = vcombine.low %v2681, %v2688
    %v2691 = vunpack.c.l.s4 1966171168
    %v2692 = vunpack.c.0.s8 %v2691
    %v2693 = vlaneseq
    %v2694 = vshrl.u32 %v2693, 7
    %v2695 = vsub.s32 %v2692, %v2694
    %v2696 = vrot.slane %v2689, %v2695
    %vm2698 = vcmask 1040384
    %vm2699 = vcmask 1041409
    %vm2700 = vmor %vm2699, %vm2698
    %vm2701 = vcmask 1042434
    %vm2702 = vmor %vm2701, %vm2700
    %vm2703 = vcmask 945155
    %vm2704 = vmor %vm2703, %vm2702
    %2705 = vst.msk [vmem:[#allocation2] sm:$0xf] %vm2704, %v2696
    // Predicated region
    $region42: #{vae_forward.1} parent=1 // pred_check
      _
    $region43: #{vae_forward.1} parent=1 // pred_check_branch
      %2707 = sbr.rel (0) target = $region45
    $region44: #{vae_forward.1} parent=1 // pred_region
      %s2709 = ssub.s32 64, 64
      %2710 = vsyncadd [#allocation3], %s2709
      %s2712 = sshll.u32 [#allocation2], 4
      %s2713 = int_to_ptr.vmem [resolvable:$true] %s2712
      %2715 = dma.vmem_to_hbm [thread:$0]  %s2713, 64, %s10, [#allocation3]
    $region45: #{vae_forward.1} parent=1 // pred_fallthru
      _
    // Predicated region
    $region46: #{vae_forward.1} parent=1 // pred_check
      _
    $region47: #{vae_forward.1} parent=1 // pred_check_branch
      %2717 = sbr.rel (0) target = $region49
    $region48: #{vae_forward.1} parent=1 // pred_region
      %s2719 = ssub.s32 32, 32
      %2720 = vsyncadd [#allocation5], %s2719
      %s2722 = sshll.u32 [#allocation4], 4
      %s2723 = int_to_ptr.vmem [resolvable:$true] %s2722
      %2725 = dma.vmem_to_hbm [thread:$0]  %s2723, 32, %s11, [#allocation5]
    $region49: #{vae_forward.1} parent=1 // pred_fallthru
      _
    // Predicated region
    $region50: #{vae_forward.1} parent=1 // pred_check
      _
    $region51: #{vae_forward.1} parent=1 // pred_check_branch
      %2727 = sbr.rel (0) target = $region53
    $region52: #{vae_forward.1} parent=1 // pred_region
      %s2729 = ssub.s32 32, 32
      %2730 = vsyncadd [#allocation5], %s2729
      %s2732 = sshll.u32 [#allocation6], 4
      %s2733 = int_to_ptr.vmem [resolvable:$true] %s2732
      %2735 = dma.vmem_to_hbm [thread:$0]  %s2733, 32, %s12, [#allocation5]
    $region53: #{vae_forward.1} parent=1 // pred_fallthru
      _
    // Predicated region
    $region54: #{vae_forward.1} parent=1 // pred_check
      _
    $region55: #{vae_forward.1} parent=1 // pred_check_branch
      %2737 = sbr.rel (0) target = $region57
    $region56: #{vae_forward.1} parent=1 // pred_region
      %2738 = dma.done [#allocation3], 64
    $region57: #{vae_forward.1} parent=1 // pred_fallthru
      _
    // Predicated region
    $region58: #{vae_forward.1} parent=1 // pred_check
      _
    $region59: #{vae_forward.1} parent=1 // pred_check_branch
      %2740 = sbr.rel (0) target = $region61
    $region60: #{vae_forward.1} parent=1 // pred_region
      %2741 = dma.done [#allocation5], 32
    $region61: #{vae_forward.1} parent=1 // pred_fallthru
      _
    // Predicated region
    $region62: #{vae_forward.1} parent=1 // pred_check
      _
    $region63: #{vae_forward.1} parent=1 // pred_check_branch
      %2743 = sbr.rel (0) target = $region65
    $region64: #{vae_forward.1} parent=1 // pred_region
      %2744 = dma.done [#allocation5], 32
    $region65: #{vae_forward.1} parent=1 // pred_fallthru
      _
    %2745 = vsyncpa [#allocation3], 1
    %2746 = vsyncpa [#allocation5], 1

</llo_original>
